<compile_context>
chip_gen: v5e
topology: v5e:2x2
jax: 0.10.0
libtpu: 0.0.40
codegen_flags: <defaults>
</compile_context>

<pallas_src>
import jax
import jax.numpy as jnp
from jax.experimental import pallas as pl
from jax.experimental.pallas import tpu as pltpu

K, S, P = 5, 2, 1          # ConvTranspose2d(kernel_size=5, stride=2, padding=1)
BN_EPS = 1e-5

# For output parity r along one spatial axis, the kernel tap used at window
# offset d (0..2, ascending padded-input index) is _TAPS[r][d]; None = unused.
_TAPS = {0: (3, 1, None), 1: (4, 2, 0)}


def _round_up(v, m):
    return ((v + m - 1) // m) * m


def _cdiv(a, b):
    return (a + b - 1) // b


def _vmem_limit_bytes():
    """Per-generation VMEM limit (v5e/v6e: 128 MiB physical, v7x: 64 MiB)."""
    try:
        cap = int(pltpu.get_tpu_info().vmem_capacity_bytes)
    except Exception:
        cap = 64 * 1024 * 1024
    return max(32 * 1024 * 1024, min(96 * 1024 * 1024, (cap * 3) // 4))


def _pick_tq(qh, qw, wp, cin, cn, cout, budget):
    """Largest even qh-row tile whose pass-1/pass-2 VMEM footprint fits."""
    cap = qh + (qh % 2)
    best = 2
    for tq in range(2, cap + 1, 2):
        est1 = (2 * tq * wp * cin * 2 +          # main input block (bf16, x2 buf)
                2 * 2 * wp * cin * 2 +           # halo block
                2 * 9 * cin * cn * 2 +           # folded weights
                2 * tq * qw * cn * 2 +           # y block (bf16, x2 buf)
                (tq + 2) * wp * cin * 2 +        # xwin scratch
                2 * qw * cn * 4)                 # per-row f32 accumulator slack
        est2 = (2 * tq * qw * cn * 2 +           # y block in
                2 * tq * 2 * qw * 2 * cout * 4 + # output block (f32, x2 buf)
                2 * tq * qw * cn * 4)            # f32 temporaries
        if max(est1, est2) + (2 << 20) <= budget:
            best = tq
    return best


def _fold_weights(w, cout, cn):
    """(Cin, Cout, 5, 5) -> (9, Cin, Cn) with the 4 phases folded into lanes."""
    cin = w.shape[0]
    w9 = jnp.zeros((3, 3, cin, cn), w.dtype)
    for dh in range(3):
        for dw in range(3):
            for rh in range(2):
                kh = _TAPS[rh][dh]
                if kh is None:
                    continue
                for rw in range(2):
                    kw = _TAPS[rw][dw]
                    if kw is None:
                        continue
                    g = 2 * rh + rw
                    w9 = w9.at[dh, dw, :, g * cout:(g + 1) * cout].set(w[:, :, kh, kw])
    return w9.reshape(9, cin, cn).astype(jnp.bfloat16)


def _make_conv_kernel(tq, qw, cn):
    """Pass 1: in-VMEM im2col + 9 MXU dots per output row + BN partial sums."""
    def kernel(xm_ref, xh_ref, w_ref, y_ref, s_ref, q_ref, xwin_ref):
        # Assemble the (tq+2)-row halo window in VMEM (main block + 2 halo rows).
        xwin_ref[0:tq] = xm_ref[...]
        xwin_ref[tq:tq + 2] = xh_ref[...]

        def row_body(dq, carry):
            s_acc, q_acc = carry
            acc = jnp.zeros((qw, cn), jnp.float32)
            for dh in range(3):
                row = xwin_ref[dq + dh]                       # (Wp, Cin) bf16
                for dw in range(3):
                    acc = acc + jnp.dot(row[dw:dw + qw, :],
                                        w_ref[dh * 3 + dw],
                                        preferred_element_type=jnp.float32)
            y16 = acc.astype(jnp.bfloat16)
            y_ref[dq] = y16                                   # (Qw, Cn) bf16 row
            yf = y16.astype(jnp.float32)                      # stats from stored values
            s_acc = s_acc + jnp.sum(yf, axis=0, keepdims=True)
            q_acc = q_acc + jnp.sum(yf * yf, axis=0, keepdims=True)
            return s_acc, q_acc

        zero = jnp.zeros((1, cn), jnp.float32)
        s, q = jax.lax.fori_loop(0, tq, row_body, (zero, zero))
        s_ref[...] = s
        q_ref[...] = q

    return kernel


def _make_bn_kernel(cout):
    """Pass 2: y*scale + shift (f32) written into the phase-factored output."""
    def kernel(y_ref, scale_ref, shift_ref, o_ref):
        y = y_ref[...].astype(jnp.float32)                    # (TQ, Qw, Cn)
        y = y * scale_ref[0] + shift_ref[0]
        o_ref[:, 0, :, :] = y[:, :, 0:2 * cout]               # rh = 0 rows
        o_ref[:, 1, :, :] = y[:, :, 2 * cout:4 * cout]        # rh = 1 rows
    return kernel


def conv_up(x, params):
    """ConvUp forward: ReLU -> ConvTranspose2d(Cin, Cout, 5, 2, 1) -> BatchNorm2d.

    x: (N, Cin, H, W) NCHW  ->  (N, Cout, 2H+1, 2W+1) NCHW, float32.
    """
    w = params["w"]                          # (Cin, Cout, K, K), PyTorch layout
    gamma, beta = params["gamma"], params["beta"]
    # NOTE: params["b"] (ConvT bias) cancels under training-mode BatchNorm and
    # is intentionally unused here.
    N, Cin, H, W = x.shape
    Cout = w.shape[1]
    Ho = (H - 1) * S - 2 * P + K             # = 2H + 1
    Wo = (W - 1) * S - 2 * P + K             # = 2W + 1
    Qh, Qw = H + 1, W + 1                    # sub-pixel grid extents
    Wp = W + 3                               # padded width (1 left, 2 right)
    four_c = 4 * Cout
    Cn = _round_up(four_c, 128) if four_c >= 128 else _round_up(four_c, 8)
    m_total = N * Ho * Wo

    vmem_limit = _vmem_limit_bytes()
    TQ = _pick_tq(Qh, Qw, Wp, Cin, Cn, Cout, vmem_limit // 2)
    QhT = _cdiv(Qh, TQ)
    TQ = _round_up(_cdiv(Qh, QhT), 2)        # shrink to minimize padded rows
    Qh_pad = QhT * TQ
    Hp = Qh_pad + 2
    half_tq = TQ // 2

    # ReLU once (relu(0)==0, so it commutes with the zero halo), NHWC, bf16.
    xr = jnp.transpose(jnp.maximum(x, 0.0), (0, 2, 3, 1)).astype(jnp.bfloat16)
    xp = jnp.pad(xr, ((0, 0), (1, Hp - 1 - H), (1, 2), (0, 0)))   # (N, Hp, Wp, Cin)

    w9 = _fold_weights(w, Cout, Cn)          # (9, Cin, Cn) bf16, grid-invariant

    cparams = pltpu.CompilerParams(
        dimension_semantics=("parallel", "parallel"),
        vmem_limit_bytes=vmem_limit)

    # ---- pass 1: folded-phase transposed conv + BN partial statistics ----
    conv_kernel = _make_conv_kernel(TQ, Qw, Cn)
    y, s_part, q_part = pl.pallas_call(
        conv_kernel,
        grid=(N, QhT),
        in_specs=[
            pl.BlockSpec((None, TQ, Wp, Cin), lambda n, t: (n, t, 0, 0)),
            # 2-row halo of the SAME padded input (rows (t+1)*TQ .. +2).
            pl.BlockSpec((None, 2, Wp, Cin),
                         lambda n, t: (n, half_tq * (t + 1), 0, 0)),
            # Grid-invariant weights: constant index_map -> fetched once.
            pl.BlockSpec((9, Cin, Cn), lambda n, t: (0, 0, 0)),
        ],
        out_specs=(
            pl.BlockSpec((None, TQ, Qw, Cn), lambda n, t: (n, t, 0, 0)),
            pl.BlockSpec((None, None, 1, Cn), lambda n, t: (n, t, 0, 0)),
            pl.BlockSpec((None, None, 1, Cn), lambda n, t: (n, t, 0, 0)),
        ),
        out_shape=(
            jax.ShapeDtypeStruct((N, Qh_pad, Qw, Cn), jnp.bfloat16),
            jax.ShapeDtypeStruct((N, QhT, 1, Cn), jnp.float32),
            jax.ShapeDtypeStruct((N, QhT, 1, Cn), jnp.float32),
        ),
        scratch_shapes=[pltpu.VMEM((TQ + 2, Wp, Cin), jnp.bfloat16)],
        compiler_params=cparams,
    )(xp, xp, w9)

    # ---- BN finalize (tiny, f32).  Training-mode batch statistics. ----
    # TODO(synk): running_mean/running_var buffer updates are training-side
    # state and do not affect the forward output, so they are not reproduced.
    S_all = jnp.sum(s_part, axis=(0, 1, 2))          # (Cn,)
    Q_all = jnp.sum(q_part, axis=(0, 1, 2))

    # Subtract the (tiny) contributions of folded-phase positions that fall
    # outside the output: qw == W for rw=1 lanes, qh == H for rh=1 lanes.
    lane_group = jnp.arange(Cn) // Cout
    mask_rw1 = ((lane_group == 1) | (lane_group == 3)).astype(jnp.float32)
    mask_rh1 = ((lane_group == 2) | (lane_group == 3)).astype(jnp.float32)
    mask_cnr = (lane_group == 3).astype(jnp.float32)

    stripA = y[:, :, Qw - 1, :].astype(jnp.float32)  # (N, Qh_pad, Cn)
    stripB = y[:, H, :, :].astype(jnp.float32)       # (N, Qw, Cn)
    corner = y[:, H, Qw - 1, :].astype(jnp.float32)  # (N, Cn)

    corr_s = (jnp.sum(stripA, axis=(0, 1)) * mask_rw1
              + jnp.sum(stripB, axis=(0, 1)) * mask_rh1
              - jnp.sum(corner, axis=0) * mask_cnr)
    corr_q = (jnp.sum(stripA * stripA, axis=(0, 1)) * mask_rw1
              + jnp.sum(stripB * stripB, axis=(0, 1)) * mask_rh1
              - jnp.sum(corner * corner, axis=0) * mask_cnr)

    sum_c = (S_all - corr_s)[:four_c].reshape(4, Cout).sum(axis=0)
    sq_c = (Q_all - corr_q)[:four_c].reshape(4, Cout).sum(axis=0)
    mean = sum_c / m_total
    var = jnp.maximum(sq_c / m_total - mean * mean, 0.0)    # biased, clamped >= 0
    scale_c = gamma.astype(jnp.float32) * jax.lax.rsqrt(var + BN_EPS)
    shift_c = beta.astype(jnp.float32) - mean * scale_c
    scale_l = jnp.zeros((Cn,), jnp.float32).at[:four_c].set(
        jnp.tile(scale_c, 4)).reshape(1, Cn)
    shift_l = jnp.zeros((Cn,), jnp.float32).at[:four_c].set(
        jnp.tile(shift_c, 4)).reshape(1, Cn)

    # ---- pass 2: BN apply fused with the sub-pixel output assembly ----
    bn_kernel = _make_bn_kernel(Cout)
    o = pl.pallas_call(
        bn_kernel,
        grid=(N, QhT),
        in_specs=[
            pl.BlockSpec((None, TQ, Qw, Cn), lambda n, t: (n, t, 0, 0)),
            pl.BlockSpec((1, Cn), lambda n, t: (0, 0)),
            pl.BlockSpec((1, Cn), lambda n, t: (0, 0)),
        ],
        out_specs=pl.BlockSpec((None, TQ, 2, Qw, 2 * Cout),
                               lambda n, t: (n, t, 0, 0, 0)),
        out_shape=jax.ShapeDtypeStruct((N, Qh_pad, 2, Qw, 2 * Cout), jnp.float32),
        compiler_params=cparams,
    )(y, scale_l, shift_l)

    # (n, qh, rh, qw, (rw, c)) row-major == interleaved NHWC: free reshape,
    # then one fused XLA slice+transpose to NCHW.
    out_nhwc = o.reshape(N, 2 * Qh_pad, 2 * Qw, Cout)[:, :Ho, :Wo, :]
    return jnp.transpose(out_nhwc, (0, 3, 1, 2))


def _ref_forward(x, params):
    """Pure-JAX reference (scatter-add formulation of ConvTranspose2d + BN)."""
    w, b, gamma, beta = params["w"], params["b"], params["gamma"], params["beta"]
    a = jnp.maximum(x.astype(jnp.float32), 0.0)
    N, Cin, H, W = x.shape
    Cout = w.shape[1]
    Ho = (H - 1) * S - 2 * P + K
    Wo = (W - 1) * S - 2 * P + K
    full = jnp.zeros((N, Cout, Ho + 2 * P, Wo + 2 * P), jnp.float32)
    for kh in range(K):
        for kw in range(K):
            contrib = jnp.einsum("nchw,cd->ndhw", a, w[:, :, kh, kw])
            full = full.at[:, :, kh:kh + (H - 1) * S + 1:S,
                                 kw:kw + (W - 1) * S + 1:S].add(contrib)
    y = full[:, :, P:P + Ho, P:P + Wo] + b[None, :, None, None]
    mu = y.mean(axis=(0, 2, 3), keepdims=True)
    var = ((y - mu) ** 2).mean(axis=(0, 2, 3), keepdims=True)
    return (y - mu) / jnp.sqrt(var + BN_EPS) * gamma[None, :, None, None] \
        + beta[None, :, None, None]


if __name__ == "__main__":
    key = jax.random.PRNGKey(0)
    kx, kw_, kb, kg, kbe = jax.random.split(key, 5)
    N, Cin, Cout, H, W = 2, 64, 32, 16, 16
    x = jax.random.normal(kx, (N, Cin, H, W), jnp.float32)
    params = {
        "w": 0.1 * jax.random.normal(kw_, (Cin, Cout, K, K), jnp.float32),
        "b": 0.1 * jax.random.normal(kb, (Cout,), jnp.float32),
        "gamma": 1.0 + 0.1 * jax.random.normal(kg, (Cout,), jnp.float32),
        "beta": 0.1 * jax.random.normal(kbe, (Cout,), jnp.float32),
    }

    # TODO(synk): only the 'relu' branch of getActivationFunction is implemented;
    # other activation choices would only change the elementwise pre-op.
    fwd = jax.jit(conv_up)
    out = jax.block_until_ready(fwd(x, params))
    ref = jax.block_until_ready(_ref_forward(x, params))

    assert out.shape == (N, Cout, 2 * H + 1, 2 * W + 1), out.shape
    max_err = float(jnp.max(jnp.abs(out - ref)))
    assert jnp.allclose(out, ref, atol=5e-2, rtol=5e-2), max_err
    print("KERNEL_OK")
</pallas_src>

<mosaic_0001>
module attributes {stable_mosaic.version = 11 : i64} {
  func.func @kernel(%arg0: i32, %arg1: i32, %arg2: memref<1x18x19x64xbf16, #tpu.memory_space<vmem>>, %arg3: memref<1x2x19x64xbf16, #tpu.memory_space<vmem>>, %arg4: memref<9x64x128xbf16, #tpu.memory_space<vmem>>, %arg5: memref<1x18x17x128xbf16, #tpu.memory_space<vmem>>, %arg6: memref<1x1x1x128xf32, #tpu.memory_space<vmem>>, %arg7: memref<1x1x1x128xf32, #tpu.memory_space<vmem>>, %arg8: memref<20x19x64xbf16, #tpu.memory_space<vmem>>) attributes {dimension_semantics = [#tpu.dimension_semantics<parallel>, #tpu.dimension_semantics<parallel>], iteration_bounds = array<i64: 2, 1>, scalar_prefetch = 0 : i64, scratch_operands = 1 : i64, tpu.core_type = #tpu.core_type<tc>, window_params = [{transform_indices = @transform_0, window_bounds = array<i64: 1, 18, 19, 64>}, {transform_indices = @transform_1, window_bounds = array<i64: 1, 2, 19, 64>}, {pipeline_mode = #tpu.pipeline_mode<synchronous>, transform_indices = @transform_2, window_bounds = array<i64: 9, 64, 128>}, {transform_indices = @transform_3, window_bounds = array<i64: 1, 18, 17, 128>}, {transform_indices = @transform_4, window_bounds = array<i64: 1, 1, 1, 128>}, {transform_indices = @transform_5, window_bounds = array<i64: 1, 1, 1, 128>}]} {
    %c0 = arith.constant 0 : index
    %c0_0 = arith.constant 0 : index
    %c0_1 = arith.constant 0 : index
    %c0_2 = arith.constant 0 : index
    %0 = vector.load %arg2[%c0, %c0_0, %c0_1, %c0_2] : memref<1x18x19x64xbf16, #tpu.memory_space<vmem>>, vector<1x18x19x64xbf16>
    %1 = vector.shape_cast %0 : vector<1x18x19x64xbf16> to vector<18x19x64xbf16>
    %c0_3 = arith.constant 0 : index
    %c0_4 = arith.constant 0 : index
    %c0_5 = arith.constant 0 : index
    %2 = vector.load %arg8[%c0_3, %c0_4, %c0_5] : memref<20x19x64xbf16, #tpu.memory_space<vmem>>, vector<18x19x64xbf16>
    tpu.vector_store %arg8[%c0_3, %c0_4, %c0_5], %1 {strides = array<i32>} : memref<20x19x64xbf16, #tpu.memory_space<vmem>>, vector<18x19x64xbf16>,
    %c0_6 = arith.constant 0 : index
    %c0_7 = arith.constant 0 : index
    %c0_8 = arith.constant 0 : index
    %c0_9 = arith.constant 0 : index
    %3 = vector.load %arg3[%c0_6, %c0_7, %c0_8, %c0_9] : memref<1x2x19x64xbf16, #tpu.memory_space<vmem>>, vector<1x2x19x64xbf16>
    %4 = vector.shape_cast %3 : vector<1x2x19x64xbf16> to vector<2x19x64xbf16>
    %c18 = arith.constant 18 : index
    %c0_10 = arith.constant 0 : index
    %c0_11 = arith.constant 0 : index
    %5 = vector.load %arg8[%c18, %c0_10, %c0_11] : memref<20x19x64xbf16, #tpu.memory_space<vmem>>, vector<2x19x64xbf16>
    tpu.vector_store %arg8[%c18, %c0_10, %c0_11], %4 {strides = array<i32>} : memref<20x19x64xbf16, #tpu.memory_space<vmem>>, vector<2x19x64xbf16>,
    %cst = arith.constant 0.000000e+00 : f32
    %6 = vector.broadcast %cst : f32 to vector<1x128xf32>
    %c0_i32 = arith.constant 0 : i32
    %c18_i32 = arith.constant 18 : i32
    %7 = arith.addi %c0_i32, %c18_i32 : i32
    %c1_i32 = arith.constant 1 : i32
    %8:2 = scf.for %arg9 = %c0_i32 to %7 step %c1_i32 iter_args(%arg10 = %6, %arg11 = %6) -> (vector<1x128xf32>, vector<1x128xf32>)  : i32 {
      %cst_21 = arith.constant 0.000000e+00 : f32
      %15 = vector.broadcast %cst_21 : f32 to vector<17x128xf32>
      %c0_i32_22 = arith.constant 0 : i32
      %16 = arith.addi %arg9, %c0_i32_22 : i32
      %17 = arith.index_cast %16 : i32 to index
      %c0_23 = arith.constant 0 : index
      %c0_24 = arith.constant 0 : index
      %18 = vector.load %arg8[%17, %c0_23, %c0_24] : memref<20x19x64xbf16, #tpu.memory_space<vmem>>, vector<1x19x64xbf16>
      %19 = vector.shape_cast %18 : vector<1x19x64xbf16> to vector<19x64xbf16>
      %20 = vector.extract_strided_slice %19 {offsets = [0, 0], sizes = [17, 64], strides = [1, 1]} : vector<19x64xbf16> to vector<17x64xbf16>
      %c0_25 = arith.constant 0 : index
      %c0_26 = arith.constant 0 : index
      %c0_27 = arith.constant 0 : index
      %21 = vector.load %arg4[%c0_25, %c0_26, %c0_27] : memref<9x64x128xbf16, #tpu.memory_space<vmem>>, vector<1x64x128xbf16>
      %22 = vector.shape_cast %21 : vector<1x64x128xbf16> to vector<64x128xbf16>
      %cst_28 = arith.constant dense<0.000000e+00> : vector<17x128xf32>
      %23 = tpu.matmul %20, %22, %cst_28 {dimension_numbers = #tpu.dot_dimension_numbers<[1], [0], [0], [1], [0, 0, 1, 1], [], []>} : vector<17x64xbf16>, vector<64x128xbf16>, vector<17x128xf32> -> vector<17x128xf32>
      %24 = arith.addf %15, %23 : vector<17x128xf32>
      %25 = vector.extract_strided_slice %19 {offsets = [1, 0], sizes = [17, 64], strides = [1, 1]} : vector<19x64xbf16> to vector<17x64xbf16>
      %c1 = arith.constant 1 : index
      %c0_29 = arith.constant 0 : index
      %c0_30 = arith.constant 0 : index
      %26 = vector.load %arg4[%c1, %c0_29, %c0_30] : memref<9x64x128xbf16, #tpu.memory_space<vmem>>, vector<1x64x128xbf16>
      %27 = vector.shape_cast %26 : vector<1x64x128xbf16> to vector<64x128xbf16>
      %cst_31 = arith.constant dense<0.000000e+00> : vector<17x128xf32>
      %28 = tpu.matmul %25, %27, %cst_31 {dimension_numbers = #tpu.dot_dimension_numbers<[1], [0], [0], [1], [0, 0, 1, 1], [], []>} : vector<17x64xbf16>, vector<64x128xbf16>, vector<17x128xf32> -> vector<17x128xf32>
      %29 = arith.addf %24, %28 : vector<17x128xf32>
      %30 = vector.extract_strided_slice %19 {offsets = [2, 0], sizes = [17, 64], strides = [1, 1]} : vector<19x64xbf16> to vector<17x64xbf16>
      %c2 = arith.constant 2 : index
      %c0_32 = arith.constant 0 : index
      %c0_33 = arith.constant 0 : index
      %31 = vector.load %arg4[%c2, %c0_32, %c0_33] : memref<9x64x128xbf16, #tpu.memory_space<vmem>>, vector<1x64x128xbf16>
      %32 = vector.shape_cast %31 : vector<1x64x128xbf16> to vector<64x128xbf16>
      %cst_34 = arith.constant dense<0.000000e+00> : vector<17x128xf32>
      %33 = tpu.matmul %30, %32, %cst_34 {dimension_numbers = #tpu.dot_dimension_numbers<[1], [0], [0], [1], [0, 0, 1, 1], [], []>} : vector<17x64xbf16>, vector<64x128xbf16>, vector<17x128xf32> -> vector<17x128xf32>
      %34 = arith.addf %29, %33 : vector<17x128xf32>
      %c1_i32_35 = arith.constant 1 : i32
      %35 = arith.addi %arg9, %c1_i32_35 : i32
      %36 = arith.index_cast %35 : i32 to index
      %c0_36 = arith.constant 0 : index
      %c0_37 = arith.constant 0 : index
      %37 = vector.load %arg8[%36, %c0_36, %c0_37] : memref<20x19x64xbf16, #tpu.memory_space<vmem>>, vector<1x19x64xbf16>
      %38 = vector.shape_cast %37 : vector<1x19x64xbf16> to vector<19x64xbf16>
      %39 = vector.extract_strided_slice %38 {offsets = [0, 0], sizes = [17, 64], strides = [1, 1]} : vector<19x64xbf16> to vector<17x64xbf16>
      %c3 = arith.constant 3 : index
      %c0_38 = arith.constant 0 : index
      %c0_39 = arith.constant 0 : index
      %40 = vector.load %arg4[%c3, %c0_38, %c0_39] : memref<9x64x128xbf16, #tpu.memory_space<vmem>>, vector<1x64x128xbf16>
      %41 = vector.shape_cast %40 : vector<1x64x128xbf16> to vector<64x128xbf16>
      %cst_40 = arith.constant dense<0.000000e+00> : vector<17x128xf32>
      %42 = tpu.matmul %39, %41, %cst_40 {dimension_numbers = #tpu.dot_dimension_numbers<[1], [0], [0], [1], [0, 0, 1, 1], [], []>} : vector<17x64xbf16>, vector<64x128xbf16>, vector<17x128xf32> -> vector<17x128xf32>
      %43 = arith.addf %34, %42 : vector<17x128xf32>
      %44 = vector.extract_strided_slice %38 {offsets = [1, 0], sizes = [17, 64], strides = [1, 1]} : vector<19x64xbf16> to vector<17x64xbf16>
      %c4 = arith.constant 4 : index
      %c0_41 = arith.constant 0 : index
      %c0_42 = arith.constant 0 : index
      %45 = vector.load %arg4[%c4, %c0_41, %c0_42] : memref<9x64x128xbf16, #tpu.memory_space<vmem>>, vector<1x64x128xbf16>
      %46 = vector.shape_cast %45 : vector<1x64x128xbf16> to vector<64x128xbf16>
      %cst_43 = arith.constant dense<0.000000e+00> : vector<17x128xf32>
      %47 = tpu.matmul %44, %46, %cst_43 {dimension_numbers = #tpu.dot_dimension_numbers<[1], [0], [0], [1], [0, 0, 1, 1], [], []>} : vector<17x64xbf16>, vector<64x128xbf16>, vector<17x128xf32> -> vector<17x128xf32>
      %48 = arith.addf %43, %47 : vector<17x128xf32>
      %49 = vector.extract_strided_slice %38 {offsets = [2, 0], sizes = [17, 64], strides = [1, 1]} : vector<19x64xbf16> to vector<17x64xbf16>
      %c5 = arith.constant 5 : index
      %c0_44 = arith.constant 0 : index
      %c0_45 = arith.constant 0 : index
      %50 = vector.load %arg4[%c5, %c0_44, %c0_45] : memref<9x64x128xbf16, #tpu.memory_space<vmem>>, vector<1x64x128xbf16>
      %51 = vector.shape_cast %50 : vector<1x64x128xbf16> to vector<64x128xbf16>
      %cst_46 = arith.constant dense<0.000000e+00> : vector<17x128xf32>
      %52 = tpu.matmul %49, %51, %cst_46 {dimension_numbers = #tpu.dot_dimension_numbers<[1], [0], [0], [1], [0, 0, 1, 1], [], []>} : vector<17x64xbf16>, vector<64x128xbf16>, vector<17x128xf32> -> vector<17x128xf32>
      %53 = arith.addf %48, %52 : vector<17x128xf32>
      %c2_i32 = arith.constant 2 : i32
      %54 = arith.addi %arg9, %c2_i32 : i32
      %55 = arith.index_cast %54 : i32 to index
      %c0_47 = arith.constant 0 : index
      %c0_48 = arith.constant 0 : index
      %56 = vector.load %arg8[%55, %c0_47, %c0_48] : memref<20x19x64xbf16, #tpu.memory_space<vmem>>, vector<1x19x64xbf16>
      %57 = vector.shape_cast %56 : vector<1x19x64xbf16> to vector<19x64xbf16>
      %58 = vector.extract_strided_slice %57 {offsets = [0, 0], sizes = [17, 64], strides = [1, 1]} : vector<19x64xbf16> to vector<17x64xbf16>
      %c6 = arith.constant 6 : index
      %c0_49 = arith.constant 0 : index
      %c0_50 = arith.constant 0 : index
      %59 = vector.load %arg4[%c6, %c0_49, %c0_50] : memref<9x64x128xbf16, #tpu.memory_space<vmem>>, vector<1x64x128xbf16>
      %60 = vector.shape_cast %59 : vector<1x64x128xbf16> to vector<64x128xbf16>
      %cst_51 = arith.constant dense<0.000000e+00> : vector<17x128xf32>
      %61 = tpu.matmul %58, %60, %cst_51 {dimension_numbers = #tpu.dot_dimension_numbers<[1], [0], [0], [1], [0, 0, 1, 1], [], []>} : vector<17x64xbf16>, vector<64x128xbf16>, vector<17x128xf32> -> vector<17x128xf32>
      %62 = arith.addf %53, %61 : vector<17x128xf32>
      %63 = vector.extract_strided_slice %57 {offsets = [1, 0], sizes = [17, 64], strides = [1, 1]} : vector<19x64xbf16> to vector<17x64xbf16>
      %c7 = arith.constant 7 : index
      %c0_52 = arith.constant 0 : index
      %c0_53 = arith.constant 0 : index
      %64 = vector.load %arg4[%c7, %c0_52, %c0_53] : memref<9x64x128xbf16, #tpu.memory_space<vmem>>, vector<1x64x128xbf16>
      %65 = vector.shape_cast %64 : vector<1x64x128xbf16> to vector<64x128xbf16>
      %cst_54 = arith.constant dense<0.000000e+00> : vector<17x128xf32>
      %66 = tpu.matmul %63, %65, %cst_54 {dimension_numbers = #tpu.dot_dimension_numbers<[1], [0], [0], [1], [0, 0, 1, 1], [], []>} : vector<17x64xbf16>, vector<64x128xbf16>, vector<17x128xf32> -> vector<17x128xf32>
      %67 = arith.addf %62, %66 : vector<17x128xf32>
      %68 = vector.extract_strided_slice %57 {offsets = [2, 0], sizes = [17, 64], strides = [1, 1]} : vector<19x64xbf16> to vector<17x64xbf16>
      %c8 = arith.constant 8 : index
      %c0_55 = arith.constant 0 : index
      %c0_56 = arith.constant 0 : index
      %69 = vector.load %arg4[%c8, %c0_55, %c0_56] : memref<9x64x128xbf16, #tpu.memory_space<vmem>>, vector<1x64x128xbf16>
      %70 = vector.shape_cast %69 : vector<1x64x128xbf16> to vector<64x128xbf16>
      %cst_57 = arith.constant dense<0.000000e+00> : vector<17x128xf32>
      %71 = tpu.matmul %68, %70, %cst_57 {dimension_numbers = #tpu.dot_dimension_numbers<[1], [0], [0], [1], [0, 0, 1, 1], [], []>} : vector<17x64xbf16>, vector<64x128xbf16>, vector<17x128xf32> -> vector<17x128xf32>
      %72 = arith.addf %67, %71 : vector<17x128xf32>
      %73 = arith.truncf %72 : vector<17x128xf32> to vector<17x128xbf16>
      %c0_58 = arith.constant 0 : index
      %74 = arith.index_cast %arg9 : i32 to index
      %c0_59 = arith.constant 0 : index
      %c0_60 = arith.constant 0 : index
      %75 = vector.load %arg5[%c0_58, %74, %c0_59, %c0_60] : memref<1x18x17x128xbf16, #tpu.memory_space<vmem>>, vector<1x1x17x128xbf16>
      %76 = vector.shape_cast %75 : vector<1x1x17x128xbf16> to vector<17x128xbf16>
      %77 = vector.shape_cast %73 : vector<17x128xbf16> to vector<1x1x17x128xbf16>
      tpu.vector_store %arg5[%c0_58, %74, %c0_59, %c0_60], %77 {strides = array<i32>} : memref<1x18x17x128xbf16, #tpu.memory_space<vmem>>, vector<1x1x17x128xbf16>,
      %78 = arith.extf %73 : vector<17x128xbf16> to vector<17x128xf32>
      %cst_61 = arith.constant dense<0.000000e+00> : vector<128xf32>
      %79 = vector.multi_reduction <add>, %78, %cst_61 [0] : vector<17x128xf32> to vector<128xf32>
      %80 = vector.shape_cast %79 : vector<128xf32> to vector<1x128xf32>
      %81 = arith.addf %arg10, %80 : vector<1x128xf32>
      %82 = arith.mulf %78, %78 : vector<17x128xf32>
      %cst_62 = arith.constant dense<0.000000e+00> : vector<128xf32>
      %83 = vector.multi_reduction <add>, %82, %cst_62 [0] : vector<17x128xf32> to vector<128xf32>
      %84 = vector.shape_cast %83 : vector<128xf32> to vector<1x128xf32>
      %85 = arith.addf %arg11, %84 : vector<1x128xf32>
      scf.yield %81, %85 : vector<1x128xf32>, vector<1x128xf32>
    }
    %c18_i32_12 = arith.constant 18 : i32
    %c0_13 = arith.constant 0 : index
    %c0_14 = arith.constant 0 : index
    %c0_15 = arith.constant 0 : index
    %c0_16 = arith.constant 0 : index
    %9 = vector.load %arg6[%c0_13, %c0_14, %c0_15, %c0_16] : memref<1x1x1x128xf32, #tpu.memory_space<vmem>>, vector<1x1x1x128xf32>
    %10 = vector.shape_cast %9 : vector<1x1x1x128xf32> to vector<1x128xf32>
    %11 = vector.shape_cast %8#0 : vector<1x128xf32> to vector<1x1x1x128xf32>
    tpu.vector_store %arg6[%c0_13, %c0_14, %c0_15, %c0_16], %11 {strides = array<i32>} : memref<1x1x1x128xf32, #tpu.memory_space<vmem>>, vector<1x1x1x128xf32>,
    %c0_17 = arith.constant 0 : index
    %c0_18 = arith.constant 0 : index
    %c0_19 = arith.constant 0 : index
    %c0_20 = arith.constant 0 : index
    %12 = vector.load %arg7[%c0_17, %c0_18, %c0_19, %c0_20] : memref<1x1x1x128xf32, #tpu.memory_space<vmem>>, vector<1x1x1x128xf32>
    %13 = vector.shape_cast %12 : vector<1x1x1x128xf32> to vector<1x128xf32>
    %14 = vector.shape_cast %8#1 : vector<1x128xf32> to vector<1x1x1x128xf32>
    tpu.vector_store %arg7[%c0_17, %c0_18, %c0_19, %c0_20], %14 {strides = array<i32>} : memref<1x1x1x128xf32, #tpu.memory_space<vmem>>, vector<1x1x1x128xf32>,
    return
  }
  func.func @transform_0(%arg0: i32, %arg1: i32) -> (i32, i32, i32, i32) {
    %c0_i32 = arith.constant 0 : i32
    %c0_i32_0 = arith.constant 0 : i32
    %c0_i32_1 = arith.constant 0 : i32
    return %arg0, %arg1, %c0_i32, %c0_i32_0 : i32, i32, i32, i32
  }
  func.func @transform_1(%arg0: i32, %arg1: i32) -> (i32, i32, i32, i32) {
    %c1_i32 = arith.constant 1 : i32
    %0 = arith.addi %arg1, %c1_i32 : i32
    %c9_i32 = arith.constant 9 : i32
    %1 = arith.muli %c9_i32, %0 : i32
    %c0_i32 = arith.constant 0 : i32
    %c0_i32_0 = arith.constant 0 : i32
    %c0_i32_1 = arith.constant 0 : i32
    return %arg0, %1, %c0_i32, %c0_i32_0 : i32, i32, i32, i32
  }
  func.func @transform_2(%arg0: i32, %arg1: i32) -> (i32, i32, i32) {
    %c0_i32 = arith.constant 0 : i32
    %c0_i32_0 = arith.constant 0 : i32
    %c0_i32_1 = arith.constant 0 : i32
    %c0_i32_2 = arith.constant 0 : i32
    return %c0_i32, %c0_i32_0, %c0_i32_1 : i32, i32, i32
  }
  func.func @transform_3(%arg0: i32, %arg1: i32) -> (i32, i32, i32, i32) {
    %c0_i32 = arith.constant 0 : i32
    %c0_i32_0 = arith.constant 0 : i32
    %c0_i32_1 = arith.constant 0 : i32
    return %arg0, %arg1, %c0_i32, %c0_i32_0 : i32, i32, i32, i32
  }
  func.func @transform_4(%arg0: i32, %arg1: i32) -> (i32, i32, i32, i32) {
    %c0_i32 = arith.constant 0 : i32
    %c0_i32_0 = arith.constant 0 : i32
    %c0_i32_1 = arith.constant 0 : i32
    return %arg0, %arg1, %c0_i32, %c0_i32_0 : i32, i32, i32, i32
  }
  func.func @transform_5(%arg0: i32, %arg1: i32) -> (i32, i32, i32, i32) {
    %c0_i32 = arith.constant 0 : i32
    %c0_i32_0 = arith.constant 0 : i32
    %c0_i32_1 = arith.constant 0 : i32
    return %arg0, %arg1, %c0_i32, %c0_i32_0 : i32, i32, i32, i32
  }
}

module attributes {stable_mosaic.version = 11 : i64} {
  func.func @kernel(%arg0: i32, %arg1: i32, %arg2: memref<1x18x17x128xbf16, #tpu.memory_space<vmem>>, %arg3: memref<1x128xf32, #tpu.memory_space<vmem>>, %arg4: memref<1x128xf32, #tpu.memory_space<vmem>>, %arg5: memref<1x18x2x17x64xf32, #tpu.memory_space<vmem>>) attributes {dimension_semantics = [#tpu.dimension_semantics<parallel>, #tpu.dimension_semantics<parallel>], iteration_bounds = array<i64: 2, 1>, scalar_prefetch = 0 : i64, scratch_operands = 0 : i64, tpu.core_type = #tpu.core_type<tc>, window_params = [{transform_indices = @transform_0, window_bounds = array<i64: 1, 18, 17, 128>}, {pipeline_mode = #tpu.pipeline_mode<synchronous>, transform_indices = @transform_1, window_bounds = array<i64: 1, 128>}, {pipeline_mode = #tpu.pipeline_mode<synchronous>, transform_indices = @transform_2, window_bounds = array<i64: 1, 128>}, {transform_indices = @transform_3, window_bounds = array<i64: 1, 18, 2, 17, 64>}]} {
    %c0 = arith.constant 0 : index
    %c0_0 = arith.constant 0 : index
    %c0_1 = arith.constant 0 : index
    %c0_2 = arith.constant 0 : index
    %0 = vector.load %arg2[%c0, %c0_0, %c0_1, %c0_2] : memref<1x18x17x128xbf16, #tpu.memory_space<vmem>>, vector<1x18x17x128xbf16>
    %1 = vector.shape_cast %0 : vector<1x18x17x128xbf16> to vector<18x17x128xbf16>
    %2 = arith.extf %1 : vector<18x17x128xbf16> to vector<18x17x128xf32>
    %c0_3 = arith.constant 0 : index
    %c0_4 = arith.constant 0 : index
    %3 = vector.load %arg3[%c0_3, %c0_4] : memref<1x128xf32, #tpu.memory_space<vmem>>, vector<1x128xf32>
    %4 = vector.shape_cast %3 : vector<1x128xf32> to vector<128xf32>
    %5 = vector.shape_cast %4 : vector<128xf32> to vector<1x1x128xf32>
    %6 = vector.broadcast %5 : vector<1x1x128xf32> to vector<18x17x128xf32>
    %7 = arith.mulf %2, %6 : vector<18x17x128xf32>
    %c0_5 = arith.constant 0 : index
    %c0_6 = arith.constant 0 : index
    %8 = vector.load %arg4[%c0_5, %c0_6] : memref<1x128xf32, #tpu.memory_space<vmem>>, vector<1x128xf32>
    %9 = vector.shape_cast %8 : vector<1x128xf32> to vector<128xf32>
    %10 = vector.shape_cast %9 : vector<128xf32> to vector<1x1x128xf32>
    %11 = vector.broadcast %10 : vector<1x1x128xf32> to vector<18x17x128xf32>
    %12 = arith.addf %7, %11 : vector<18x17x128xf32>
    %13 = vector.extract_strided_slice %12 {offsets = [0, 0, 0], sizes = [18, 17, 64], strides = [1, 1, 1]} : vector<18x17x128xf32> to vector<18x17x64xf32>
    %c0_7 = arith.constant 0 : index
    %c0_8 = arith.constant 0 : index
    %c0_9 = arith.constant 0 : index
    %c0_10 = arith.constant 0 : index
    %c0_11 = arith.constant 0 : index
    %14 = vector.load %arg5[%c0_7, %c0_8, %c0_9, %c0_10, %c0_11] : memref<1x18x2x17x64xf32, #tpu.memory_space<vmem>>, vector<1x18x1x17x64xf32>
    %15 = vector.shape_cast %14 : vector<1x18x1x17x64xf32> to vector<18x17x64xf32>
    %16 = vector.shape_cast %13 : vector<18x17x64xf32> to vector<1x18x1x17x64xf32>
    tpu.vector_store %arg5[%c0_7, %c0_8, %c0_9, %c0_10, %c0_11], %16 {strides = array<i32>} : memref<1x18x2x17x64xf32, #tpu.memory_space<vmem>>, vector<1x18x1x17x64xf32>,
    %17 = vector.extract_strided_slice %12 {offsets = [0, 0, 64], sizes = [18, 17, 64], strides = [1, 1, 1]} : vector<18x17x128xf32> to vector<18x17x64xf32>
    %c0_12 = arith.constant 0 : index
    %c0_13 = arith.constant 0 : index
    %c1 = arith.constant 1 : index
    %c0_14 = arith.constant 0 : index
    %c0_15 = arith.constant 0 : index
    %18 = vector.load %arg5[%c0_12, %c0_13, %c1, %c0_14, %c0_15] : memref<1x18x2x17x64xf32, #tpu.memory_space<vmem>>, vector<1x18x1x17x64xf32>
    %19 = vector.shape_cast %18 : vector<1x18x1x17x64xf32> to vector<18x17x64xf32>
    %20 = vector.shape_cast %17 : vector<18x17x64xf32> to vector<1x18x1x17x64xf32>
    tpu.vector_store %arg5[%c0_12, %c0_13, %c1, %c0_14, %c0_15], %20 {strides = array<i32>} : memref<1x18x2x17x64xf32, #tpu.memory_space<vmem>>, vector<1x18x1x17x64xf32>,
    return
  }
  func.func @transform_0(%arg0: i32, %arg1: i32) -> (i32, i32, i32, i32) {
    %c0_i32 = arith.constant 0 : i32
    %c0_i32_0 = arith.constant 0 : i32
    %c0_i32_1 = arith.constant 0 : i32
    return %arg0, %arg1, %c0_i32, %c0_i32_0 : i32, i32, i32, i32
  }
  func.func @transform_1(%arg0: i32, %arg1: i32) -> (i32, i32) {
    %c0_i32 = arith.constant 0 : i32
    %c0_i32_0 = arith.constant 0 : i32
    %c0_i32_1 = arith.constant 0 : i32
    return %c0_i32, %c0_i32_0 : i32, i32
  }
  func.func @transform_2(%arg0: i32, %arg1: i32) -> (i32, i32) {
    %c0_i32 = arith.constant 0 : i32
    %c0_i32_0 = arith.constant 0 : i32
    %c0_i32_1 = arith.constant 0 : i32
    return %c0_i32, %c0_i32_0 : i32, i32
  }
  func.func @transform_3(%arg0: i32, %arg1: i32) -> (i32, i32, i32, i32, i32) {
    %c0_i32 = arith.constant 0 : i32
    %c0_i32_0 = arith.constant 0 : i32
    %c0_i32_1 = arith.constant 0 : i32
    %c0_i32_2 = arith.constant 0 : i32
    return %arg0, %arg1, %c0_i32, %c0_i32_0, %c0_i32_1 : i32, i32, i32, i32, i32
  }
}

</mosaic_0001>

<llo_original>
// kernel: tile.18
$region0: #{tile.18}
  #allocation0 [shape = 's32[1]{0}', space=sflag, size = 0x4, scoped, tag = 'scoped memory for tile.18']
  %s0 = inlined_call_operand.vmem [shape: f32[32], index: 0, kind: input, shape index: {}]
  %s1 = inlined_call_operand.vmem [shape: f32[4,32], index: 1, kind: output, shape index: {}]
  // Predicated region
  $region2: #{tile.18} parent=0 // pred_check
    _
  $region3: #{tile.18} parent=0 // pred_check_branch
    %3 = sbr.rel (0) target = $region5
  $region4: #{tile.18} parent=0 // pred_region
    _
  $region5: #{tile.18} parent=0 // pred_fallthru
    _
  %v4 = vld [vmem:[%s0] ss:$0 sm:$0xff]
  %5 = vst [vmem:[%s1] sm:$0xf] %v4

// kernel: conv_up.3
$region0: #{conv_up.3}
  #allocation0 [shape = 'u32[]', space=smem, size = 0x4, offset = 0x4, fixed_abs, tag = 'smem constant byte address 0x4 - core index']
  #allocation1 [shape = 'u32[72,128]{1,0:T(1,128)}', space=vmem, size = 0x9000, scoped, tag = 'internal scratch']
  %s0 = inlined_call_operand.vmem [shape: bf16[2,18,17,128], index: 0, kind: input, shape index: {}]
  %s1 = inlined_call_operand.vmem [shape: f32[1,128], index: 1, kind: input, shape index: {}]
  %s2 = inlined_call_operand.vmem [shape: f32[1,128], index: 2, kind: input, shape index: {}]
  %s3 = inlined_call_operand.vmem [shape: f32[2,18,2,17,64], index: 3, kind: output, shape index: {}]
  %s4 = sld [smem:[#allocation0]]
  $region45: #{conv_up.3} parent=0
    _
  %s6 = ssub.s32 1, %s4
  %s7 = scalar_select 0, %s6, %s4
  loop: start=0, step=1, limit=4
  $region2: #{conv_up.3} parent=0 // loop_pre_header
    _
  $region3: #{conv_up.3} parent=0 // loop_header
    %s9 = sphi 0, %s13
    %p10 = scmp.ge.s32.totalorder %s9, 4
    %s16 = sphi 0, %s28
    %s17 = sphi 0, %s24
    %s18 = sphi 0, %s16
    %s19 = sphi 0, %s17
    %s20 = sphi 0, %s18
    %s21 = sphi 0, %s19
    %s33 = sphi 0, %s35
    %s36 = sphi 0, %s33
    %s37 = sphi 0, %s36
    %s53 = sphi 0, %s37
    %s57 = sphi 0, %s57
    %s59 = sphi 0, %s57
    %s60 = sphi 0, %s59
    %s74 = sphi 0, %s60
    %s78 = sphi 0, %s78
    %s80 = sphi 0, %s78
    %s81 = sphi 0, %s80
    %s95 = sphi 0, %s81
    %s103 = sphi 0, %s105
    %s106 = sphi 0, %s103
    %s107 = sphi 0, %s106
    %s123 = sphi 0, %s107
  $region4: #{conv_up.3} parent=0 // loop_header_branch
    %12 = sbr.rel (%p10) target = $region8
  $region5: #{conv_up.3} parent=0 // loop_body
    %s14 = ssub.s32 %s9, 1
    %s15 = ssub.s32 %s9, 2
    %s22 = sadd.s32 1, %s17
    %p23 = scmp.ge.s32.totalorder %s22, 1
    %s24 = scalar_select %p23, 0, %s22
    %s25 = sadd.s32 1, %s16
    %s26 = scalar_select %p23, %s25, %s16
    %p27 = scmp.ge.s32.totalorder %s26, 2
    %s28 = scalar_select %p27, 0, %s26
    %s29 = ssub.s32 %s16, %s28
    %s30 = ssub.s32 %s17, %s24
    %s31 = sor.u32 %s29, %s30
    %p32 = scmp.eq.s32.totalorder %s31, 0
    %s34 = sadd.s32 %s33, 1
    %s35 = scalar_select %p32, %s33, %s34
    %p38 = pneg %p32
    %p39 = scmp.eq.s32.totalorder %s9, 1
    %p40 = por %p38, %p39
    %p41 = scmp.ne.s32.totalorder %s33, %s36
    %p42 = scmp.eq.s32.totalorder %s9, 0
    %p43 = por %p41, %p42
    %p44 = scmp.ne.s32.totalorder %s33, %s36
    %p45 = scmp.eq.s32.totalorder %s14, 1
    %p46 = por %p44, %p45
    %p47 = scmp.ne.s32.totalorder %s36, %s37
    %p48 = scmp.eq.s32.totalorder %s14, 0
    %p49 = por %p47, %p48
    %p50 = scmp.ne.s32.totalorder %s36, %s37
    %p51 = scmp.eq.s32.totalorder %s15, 1
    %p52 = por %p50, %p51
    %p54 = scmp.ne.s32.totalorder %s37, %s53
    %p55 = scmp.eq.s32.totalorder %s15, 0
    %p56 = por %p54, %p55
    %s58 = sadd.s32 %s57, 1
    %p61 = scmp.eq.s32.totalorder %s9, 1
    %p62 = scmp.ne.s32.totalorder %s57, %s59
    %p63 = scmp.eq.s32.totalorder %s9, 0
    %p64 = por %p62, %p63
    %p65 = scmp.ne.s32.totalorder %s57, %s59
    %p66 = scmp.eq.s32.totalorder %s14, 1
    %p67 = por %p65, %p66
    %p68 = scmp.ne.s32.totalorder %s59, %s60
    %p69 = scmp.eq.s32.totalorder %s14, 0
    %p70 = por %p68, %p69
    %p71 = scmp.ne.s32.totalorder %s59, %s60
    %p72 = scmp.eq.s32.totalorder %s15, 1
    %p73 = por %p71, %p72
    %p75 = scmp.ne.s32.totalorder %s60, %s74
    %p76 = scmp.eq.s32.totalorder %s15, 0
    %p77 = por %p75, %p76
    %s79 = sadd.s32 %s78, 1
    %p82 = scmp.eq.s32.totalorder %s9, 1
    %p83 = scmp.ne.s32.totalorder %s78, %s80
    %p84 = scmp.eq.s32.totalorder %s9, 0
    %p85 = por %p83, %p84
    %p86 = scmp.ne.s32.totalorder %s78, %s80
    %p87 = scmp.eq.s32.totalorder %s14, 1
    %p88 = por %p86, %p87
    %p89 = scmp.ne.s32.totalorder %s80, %s81
    %p90 = scmp.eq.s32.totalorder %s14, 0
    %p91 = por %p89, %p90
    %p92 = scmp.ne.s32.totalorder %s80, %s81
    %p93 = scmp.eq.s32.totalorder %s15, 1
    %p94 = por %p92, %p93
    %p96 = scmp.ne.s32.totalorder %s81, %s95
    %p97 = scmp.eq.s32.totalorder %s15, 0
    %p98 = por %p96, %p97
    %s99 = ssub.s32 %s16, %s28
    %s100 = ssub.s32 %s17, %s24
    %s101 = sor.u32 %s99, %s100
    %p102 = scmp.eq.s32.totalorder %s101, 0
    %s104 = sadd.s32 %s103, 1
    %s105 = scalar_select %p102, %s103, %s104
    %p108 = pneg %p102
    %p109 = scmp.eq.s32.totalorder %s9, 1
    %p110 = por %p108, %p109
    %p111 = scmp.ne.s32.totalorder %s103, %s106
    %p112 = scmp.eq.s32.totalorder %s9, 0
    %p113 = por %p111, %p112
    %p114 = scmp.ne.s32.totalorder %s103, %s106
    %p115 = scmp.eq.s32.totalorder %s14, 1
    %p116 = por %p114, %p115
    %p117 = scmp.ne.s32.totalorder %s106, %s107
    %p118 = scmp.eq.s32.totalorder %s14, 0
    %p119 = por %p117, %p118
    %p120 = scmp.ne.s32.totalorder %s106, %s107
    %p121 = scmp.eq.s32.totalorder %s15, 1
    %p122 = por %p120, %p121
    %p124 = scmp.ne.s32.totalorder %s107, %s123
    %p125 = scmp.eq.s32.totalorder %s15, 0
    %p126 = por %p124, %p125
    %p127 = scmp.le.s32.totalorder 1, %s9
    %p128 = scmp.lt.s32.totalorder %s9, 3
    %p129 = pnand %p127, %p128
    %p130 = pneg %p129
    // Predicated region
    $region9: #{conv_up.3} parent=5 // pred_check
      _
    $region10: #{conv_up.3} parent=5 // pred_check_branch
      %132 = sbr.rel (%p129) target = $region12
    $region11: #{conv_up.3} parent=5 // pred_region
      %s133 = ssub.s32 %s9, 1
      // Predicated region
      $region13: #{conv_up.3} parent=11 // pred_check
        %p134 = pneg %p70
      $region14: #{conv_up.3} parent=11 // pred_check_branch
        %136 = sbr.rel (%p134) target = $region16
      $region15: #{conv_up.3} parent=11 // pred_region
        _
      $region16: #{conv_up.3} parent=11 // pred_fallthru
        _
      // Predicated region
      $region17: #{conv_up.3} parent=11 // pred_check
        %p137 = pneg %p91
      $region18: #{conv_up.3} parent=11 // pred_check_branch
        %139 = sbr.rel (%p137) target = $region20
      $region19: #{conv_up.3} parent=11 // pred_region
        _
      $region20: #{conv_up.3} parent=11 // pred_fallthru
        _
    $region12: #{conv_up.3} parent=5 // pred_fallthru
      _
    %p140 = scmp.lt.s32.totalorder %s9, 2
    // Predicated region
    $region21: #{conv_up.3} parent=5 // pred_check
      %p141 = pneg %p140
    $region22: #{conv_up.3} parent=5 // pred_check_branch
      %143 = sbr.rel (%p141) target = $region24
    $region23: #{conv_up.3} parent=5 // pred_region
      // Predicated region
      $region25: #{conv_up.3} parent=23 // pred_check
        %p144 = pneg %p43
      $region26: #{conv_up.3} parent=23 // pred_check_branch
        %146 = sbr.rel (%p144) target = $region28
      $region27: #{conv_up.3} parent=23 // pred_region
        %s147 = smul.u32 18, %s17
        %p148 = scmp.lt.s32.totalorder %s16, 1
        %s149 = scalar_select %p148, %s16, 1
        %p150 = scmp.lt.s32.totalorder %s147, 17
        %s151 = scalar_select %p150, %s147, 17
        %s152 = smul.addr %s151, 3
        %s153 = smul.addr %s149, 54
        %s154 = sadd.s32 %s152, %s153
        %s155 = smul.addr %s154, 4
        %s156 = scalar_lea.vmem %s0, %s155
        %s157 = smul.u32 18, %s17
      $region28: #{conv_up.3} parent=23 // pred_fallthru
        _
    $region24: #{conv_up.3} parent=5 // pred_fallthru
      _
    %p158 = scmp.le.s32.totalorder 1, %s9
    %p159 = scmp.lt.s32.totalorder %s9, 3
    %p160 = pnand %p158, %p159
    %p161 = pneg %p160
    // Predicated region
    $region29: #{conv_up.3} parent=5 // pred_check
      _
    $region30: #{conv_up.3} parent=5 // pred_check_branch
      %163 = sbr.rel (%p160) target = $region32
    $region31: #{conv_up.3} parent=5 // pred_region
      %s164 = ssub.s32 %s9, 1
      %s165 = smul.u32 18, %s19
      %p166 = scmp.lt.s32.totalorder %s18, 1
      %s167 = scalar_select %p166, %s18, 1
      %p168 = scmp.lt.s32.totalorder %s165, 17
      %s169 = scalar_select %p168, %s165, 17
      %s170 = smul.addr %s169, 3
      %s171 = smul.addr %s167, 54
      %s172 = sadd.s32 %s170, %s171
      %s173 = smul.addr %s172, 4
      %s174 = scalar_lea.vmem %s0, %s173
      %p175 = pneg %p49
      %p176 = pneg %p46
      %p177 = pneg %p70
      %p178 = pneg %p67
      %p179 = pneg %p91
      %p180 = pneg %p88
      %p181 = pneg %p119
      %p182 = pneg %p116
      %s183 = smul.u32 18, %s19
      %p184 = scmp.lt.s32.totalorder %s18, 1
      %s185 = scalar_select %p184, %s18, 1
      %p186 = scmp.lt.s32.totalorder %s183, 17
      %s187 = scalar_select %p186, %s183, 17
      %s188 = smul.addr %s187, 6
      %s189 = smul.addr %s185, 108
      %s190 = sadd.s32 %s188, %s189
      %s191 = smul.addr %s190, 8
      %s192 = scalar_lea.vmem %s3, %s191
      %s193 = smul.u32 18, %s19
      %p194 = scmp.lt.s32.totalorder %s18, 1
      %s195 = scalar_select %p194, %s18, 1
      %p196 = scmp.lt.s32.totalorder %s193, 17
      %s197 = scalar_select %p196, %s193, 17
      %s198 = smul.addr %s197, 3
      %s199 = smul.addr %s195, 54
      %s200 = sadd.s32 %s198, %s199
      %s201 = smul.addr %s200, 4
      %s202 = scalar_lea.vmem %s0, %s201
      %s203 = smul.u32 18, %s19
      %s204 = smul.u32 18, %s19
      %p205 = scmp.lt.s32.totalorder %s18, 1
      %s206 = scalar_select %p205, %s18, 1
      %p207 = scmp.lt.s32.totalorder %s204, 17
      %s208 = scalar_select %p207, %s204, 17
      %s209 = smul.addr %s208, 6
      %s210 = smul.addr %s206, 108
      %s211 = sadd.s32 %s209, %s210
      %s212 = smul.addr %s211, 8
      %s213 = scalar_lea.vmem %s3, %s212
      %s214 = smul.u32 18, %s19
      %v215 = vld [vmem:[%s202] sm:$0xf]
      %v216 = vld [vmem:[%s202 + $0x4] sm:$0xf]
      %v217 = vld [vmem:[%s202 + $0x8] sm:$0x1]
      %v218 = vld [vmem:[%s202 + $0xc] sm:$0xf]
      %v219 = vld [vmem:[%s202 + $0x10] sm:$0xf]
      %v220 = vld [vmem:[%s202 + $0x14] sm:$0x1]
      %v221 = vld [vmem:[%s202 + $0x18] sm:$0xf]
      %v222 = vld [vmem:[%s202 + $0x1c] sm:$0xf]
      %v223 = vld [vmem:[%s202 + $0x20] sm:$0x1]
      %v224 = vld [vmem:[%s202 + $0x24] sm:$0xf]
      %v225 = vld [vmem:[%s202 + $0x28] sm:$0xf]
      %v226 = vld [vmem:[%s202 + $0x2c] sm:$0x1]
      %v227 = vld [vmem:[%s202 + $0x30] sm:$0xf]
      %v228 = vld [vmem:[%s202 + $0x34] sm:$0xf]
      %v229 = vld [vmem:[%s202 + $0x38] sm:$0x1]
      %v230 = vld [vmem:[%s202 + $0x3c] sm:$0xf]
      %v231 = vld [vmem:[%s202 + $0x40] sm:$0xf]
      %v232 = vld [vmem:[%s202 + $0x44] sm:$0x1]
      %v233 = vld [vmem:[%s202 + $0x48] sm:$0xf]
      %v234 = vld [vmem:[%s202 + $0x4c] sm:$0xf]
      %v235 = vld [vmem:[%s202 + $0x50] sm:$0x1]
      %v236 = vld [vmem:[%s202 + $0x54] sm:$0xf]
      %v237 = vld [vmem:[%s202 + $0x58] sm:$0xf]
      %v238 = vld [vmem:[%s202 + $0x5c] sm:$0x1]
      %v239 = vld [vmem:[%s202 + $0x60] sm:$0xf]
      %v240 = vld [vmem:[%s202 + $0x64] sm:$0xf]
      %v241 = vld [vmem:[%s202 + $0x68] sm:$0x1]
      %v242 = vld [vmem:[%s202 + $0x6c] sm:$0xf]
      %v243 = vld [vmem:[%s202 + $0x70] sm:$0xf]
      %v244 = vld [vmem:[%s202 + $0x74] sm:$0x1]
      %v245 = vld [vmem:[%s202 + $0x78] sm:$0xf]
      %v246 = vld [vmem:[%s202 + $0x7c] sm:$0xf]
      %v247 = vld [vmem:[%s202 + $0x80] sm:$0x1]
      %v248 = vld [vmem:[%s202 + $0x84] sm:$0xf]
      %v249 = vld [vmem:[%s202 + $0x88] sm:$0xf]
      %v250 = vld [vmem:[%s202 + $0x8c] sm:$0x1]
      %v251 = vld [vmem:[%s202 + $0x90] sm:$0xf]
      %v252 = vld [vmem:[%s202 + $0x94] sm:$0xf]
      %v253 = vld [vmem:[%s202 + $0x98] sm:$0x1]
      %v254 = vld [vmem:[%s202 + $0x9c] sm:$0xf]
      %v255 = vld [vmem:[%s202 + $0xa0] sm:$0xf]
      %v256 = vld [vmem:[%s202 + $0xa4] sm:$0x1]
      %v257 = vld [vmem:[%s202 + $0xa8] sm:$0xf]
      %v258 = vld [vmem:[%s202 + $0xac] sm:$0xf]
      %v259 = vld [vmem:[%s202 + $0xb0] sm:$0x1]
      %v260 = vld [vmem:[%s202 + $0xb4] sm:$0xf]
      %v261 = vld [vmem:[%s202 + $0xb8] sm:$0xf]
      %v262 = vld [vmem:[%s202 + $0xbc] sm:$0x1]
      %v263 = vld [vmem:[%s202 + $0xc0] sm:$0xf]
      %v264 = vld [vmem:[%s202 + $0xc4] sm:$0xf]
      %v265 = vld [vmem:[%s202 + $0xc8] sm:$0x1]
      %v266 = vld [vmem:[%s202 + $0xcc] sm:$0xf]
      %v267 = vld [vmem:[%s202 + $0xd0] sm:$0xf]
      %v268 = vld [vmem:[%s202 + $0xd4] sm:$0x1]
      %v269 = vunpack.c.l.bf16 %v215
      %v270 = vunpack.c.l.bf16 %v216
      %v271 = vunpack.c.l.bf16 %v217
      %v272 = vunpack.c.l.bf16 %v218
      %v273 = vunpack.c.l.bf16 %v219
      %v274 = vunpack.c.l.bf16 %v220
      %v275 = vunpack.c.l.bf16 %v221
      %v276 = vunpack.c.l.bf16 %v222
      %v277 = vunpack.c.l.bf16 %v223
      %v278 = vunpack.c.l.bf16 %v224
      %v279 = vunpack.c.l.bf16 %v225
      %v280 = vunpack.c.l.bf16 %v226
      %v281 = vunpack.c.l.bf16 %v227
      %v282 = vunpack.c.l.bf16 %v228
      %v283 = vunpack.c.l.bf16 %v229
      %v284 = vunpack.c.l.bf16 %v230
      %v285 = vunpack.c.l.bf16 %v231
      %v286 = vunpack.c.l.bf16 %v232
      %v287 = vunpack.c.l.bf16 %v233
      %v288 = vunpack.c.l.bf16 %v234
      %v289 = vunpack.c.l.bf16 %v235
      %v290 = vunpack.c.l.bf16 %v236
      %v291 = vunpack.c.l.bf16 %v237
      %v292 = vunpack.c.l.bf16 %v238
      %v293 = vunpack.c.l.bf16 %v239
      %v294 = vunpack.c.l.bf16 %v240
      %v295 = vunpack.c.l.bf16 %v241
      %v296 = vunpack.c.l.bf16 %v242
      %v297 = vunpack.c.l.bf16 %v243
      %v298 = vunpack.c.l.bf16 %v244
      %v299 = vunpack.c.l.bf16 %v245
      %v300 = vunpack.c.l.bf16 %v246
      %v301 = vunpack.c.l.bf16 %v247
      %v302 = vunpack.c.l.bf16 %v248
      %v303 = vunpack.c.l.bf16 %v249
      %v304 = vunpack.c.l.bf16 %v250
      %v305 = vunpack.c.l.bf16 %v251
      %v306 = vunpack.c.l.bf16 %v252
      %v307 = vunpack.c.l.bf16 %v253
      %v308 = vunpack.c.l.bf16 %v254
      %v309 = vunpack.c.l.bf16 %v255
      %v310 = vunpack.c.l.bf16 %v256
      %v311 = vunpack.c.l.bf16 %v257
      %v312 = vunpack.c.l.bf16 %v258
      %v313 = vunpack.c.l.bf16 %v259
      %v314 = vunpack.c.l.bf16 %v260
      %v315 = vunpack.c.l.bf16 %v261
      %v316 = vunpack.c.l.bf16 %v262
      %v317 = vunpack.c.l.bf16 %v263
      %v318 = vunpack.c.l.bf16 %v264
      %v319 = vunpack.c.l.bf16 %v265
      %v320 = vunpack.c.l.bf16 %v266
      %v321 = vunpack.c.l.bf16 %v267
      %v322 = vunpack.c.l.bf16 %v268
      %v323 = vld [vmem:[%s1] sm:$0x1]
      %v325 = vperm.slane %v323, 0
      %v327 = vmul.f32 %v269, %v325
      %v328 = vmul.f32 %v270, %v325
      %v329 = vmul.f32 %v271, %v325
      %v330 = vmul.f32 %v272, %v325
      %v331 = vmul.f32 %v273, %v325
      %v332 = vmul.f32 %v274, %v325
      %v333 = vmul.f32 %v275, %v325
      %v334 = vmul.f32 %v276, %v325
      %v335 = vmul.f32 %v277, %v325
      %v336 = vmul.f32 %v278, %v325
      %v337 = vmul.f32 %v279, %v325
      %v338 = vmul.f32 %v280, %v325
      %v339 = vmul.f32 %v281, %v325
      %v340 = vmul.f32 %v282, %v325
      %v341 = vmul.f32 %v283, %v325
      %v342 = vmul.f32 %v284, %v325
      %v343 = vmul.f32 %v285, %v325
      %v344 = vmul.f32 %v286, %v325
      %v345 = vmul.f32 %v287, %v325
      %v346 = vmul.f32 %v288, %v325
      %v347 = vmul.f32 %v289, %v325
      %v348 = vmul.f32 %v290, %v325
      %v349 = vmul.f32 %v291, %v325
      %v350 = vmul.f32 %v292, %v325
      %v351 = vmul.f32 %v293, %v325
      %v352 = vmul.f32 %v294, %v325
      %v353 = vmul.f32 %v295, %v325
      %v354 = vmul.f32 %v296, %v325
      %v355 = vmul.f32 %v297, %v325
      %v356 = vmul.f32 %v298, %v325
      %v357 = vmul.f32 %v299, %v325
      %v358 = vmul.f32 %v300, %v325
      %v359 = vmul.f32 %v301, %v325
      %v360 = vmul.f32 %v302, %v325
      %v361 = vmul.f32 %v303, %v325
      %v362 = vmul.f32 %v304, %v325
      %v363 = vmul.f32 %v305, %v325
      %v364 = vmul.f32 %v306, %v325
      %v365 = vmul.f32 %v307, %v325
      %v366 = vmul.f32 %v308, %v325
      %v367 = vmul.f32 %v309, %v325
      %v368 = vmul.f32 %v310, %v325
      %v369 = vmul.f32 %v311, %v325
      %v370 = vmul.f32 %v312, %v325
      %v371 = vmul.f32 %v313, %v325
      %v372 = vmul.f32 %v314, %v325
      %v373 = vmul.f32 %v315, %v325
      %v374 = vmul.f32 %v316, %v325
      %v375 = vmul.f32 %v317, %v325
      %v376 = vmul.f32 %v318, %v325
      %v377 = vmul.f32 %v319, %v325
      %v378 = vmul.f32 %v320, %v325
      %v379 = vmul.f32 %v321, %v325
      %v380 = vmul.f32 %v322, %v325
      %v381 = vld [vmem:[%s2] sm:$0x1]
      %v383 = vperm.slane %v381, 0
      %v385 = vadd.f32 %v327, %v383
      %v386 = vadd.f32 %v328, %v383
      %v387 = vadd.f32 %v329, %v383
      %v388 = vadd.f32 %v330, %v383
      %v389 = vadd.f32 %v331, %v383
      %v390 = vadd.f32 %v332, %v383
      %v391 = vadd.f32 %v333, %v383
      %v392 = vadd.f32 %v334, %v383
      %v393 = vadd.f32 %v335, %v383
      %v394 = vadd.f32 %v336, %v383
      %v395 = vadd.f32 %v337, %v383
      %v396 = vadd.f32 %v338, %v383
      %v397 = vadd.f32 %v339, %v383
      %v398 = vadd.f32 %v340, %v383
      %v399 = vadd.f32 %v341, %v383
      %v400 = vadd.f32 %v342, %v383
      %v401 = vadd.f32 %v343, %v383
      %v402 = vadd.f32 %v344, %v383
      %v403 = vadd.f32 %v345, %v383
      %v404 = vadd.f32 %v346, %v383
      %v405 = vadd.f32 %v347, %v383
      %v406 = vadd.f32 %v348, %v383
      %v407 = vadd.f32 %v349, %v383
      %v408 = vadd.f32 %v350, %v383
      %v409 = vadd.f32 %v351, %v383
      %v410 = vadd.f32 %v352, %v383
      %v411 = vadd.f32 %v353, %v383
      %v412 = vadd.f32 %v354, %v383
      %v413 = vadd.f32 %v355, %v383
      %v414 = vadd.f32 %v356, %v383
      %v415 = vadd.f32 %v357, %v383
      %v416 = vadd.f32 %v358, %v383
      %v417 = vadd.f32 %v359, %v383
      %v418 = vadd.f32 %v360, %v383
      %v419 = vadd.f32 %v361, %v383
      %v420 = vadd.f32 %v362, %v383
      %v421 = vadd.f32 %v363, %v383
      %v422 = vadd.f32 %v364, %v383
      %v423 = vadd.f32 %v365, %v383
      %v424 = vadd.f32 %v366, %v383
      %v425 = vadd.f32 %v367, %v383
      %v426 = vadd.f32 %v368, %v383
      %v427 = vadd.f32 %v369, %v383
      %v428 = vadd.f32 %v370, %v383
      %v429 = vadd.f32 %v371, %v383
      %v430 = vadd.f32 %v372, %v383
      %v431 = vadd.f32 %v373, %v383
      %v432 = vadd.f32 %v374, %v383
      %v433 = vadd.f32 %v375, %v383
      %v434 = vadd.f32 %v376, %v383
      %v435 = vadd.f32 %v377, %v383
      %v436 = vadd.f32 %v378, %v383
      %v437 = vadd.f32 %v379, %v383
      %v438 = vadd.f32 %v380, %v383
      %vm439 = vcmask 523264
      %440 = vst.msk [vmem:[%s213] sm:$0xff] %vm439, %v385
      %441 = vst.msk [vmem:[%s213 + $0x8] sm:$0xff] %vm439, %v386
      %vm442 = vcmask 516096
      %443 = vst.msk [vmem:[%s213 + $0x10] sm:$0x1] %vm442, %v387
      %444 = vst.msk [vmem:[%s213 + $0x30] sm:$0xff] %vm439, %v388
      %445 = vst.msk [vmem:[%s213 + $0x38] sm:$0xff] %vm439, %v389
      %446 = vst.msk [vmem:[%s213 + $0x40] sm:$0x1] %vm442, %v390
      %447 = vst.msk [vmem:[%s213 + $0x60] sm:$0xff] %vm439, %v391
      %448 = vst.msk [vmem:[%s213 + $0x68] sm:$0xff] %vm439, %v392
      %449 = vst.msk [vmem:[%s213 + $0x70] sm:$0x1] %vm442, %v393
      %450 = vst.msk [vmem:[%s213 + $0x90] sm:$0xff] %vm439, %v394
      %451 = vst.msk [vmem:[%s213 + $0x98] sm:$0xff] %vm439, %v395
      %452 = vst.msk [vmem:[%s213 + $0xa0] sm:$0x1] %vm442, %v396
      %453 = vst.msk [vmem:[%s213 + $0xc0] sm:$0xff] %vm439, %v397
      %454 = vst.msk [vmem:[%s213 + $0xc8] sm:$0xff] %vm439, %v398
      %455 = vst.msk [vmem:[%s213 + $0xd0] sm:$0x1] %vm442, %v399
      %456 = vst.msk [vmem:[%s213 + $0xf0] sm:$0xff] %vm439, %v400
      %457 = vst.msk [vmem:[%s213 + $0xf8] sm:$0xff] %vm439, %v401
      %458 = vst.msk [vmem:[%s213 + $0x100] sm:$0x1] %vm442, %v402
      %459 = vst.msk [vmem:[%s213 + $0x120] sm:$0xff] %vm439, %v403
      %460 = vst.msk [vmem:[%s213 + $0x128] sm:$0xff] %vm439, %v404
      %461 = vst.msk [vmem:[%s213 + $0x130] sm:$0x1] %vm442, %v405
      %462 = vst.msk [vmem:[%s213 + $0x150] sm:$0xff] %vm439, %v406
      %463 = vst.msk [vmem:[%s213 + $0x158] sm:$0xff] %vm439, %v407
      %464 = vst.msk [vmem:[%s213 + $0x160] sm:$0x1] %vm442, %v408
      %465 = vst.msk [vmem:[%s213 + $0x180] sm:$0xff] %vm439, %v409
      %466 = vst.msk [vmem:[%s213 + $0x188] sm:$0xff] %vm439, %v410
      %467 = vst.msk [vmem:[%s213 + $0x190] sm:$0x1] %vm442, %v411
      %468 = vst.msk [vmem:[%s213 + $0x1b0] sm:$0xff] %vm439, %v412
      %469 = vst.msk [vmem:[%s213 + $0x1b8] sm:$0xff] %vm439, %v413
      %470 = vst.msk [vmem:[%s213 + $0x1c0] sm:$0x1] %vm442, %v414
      %471 = vst.msk [vmem:[%s213 + $0x1e0] sm:$0xff] %vm439, %v415
      %472 = vst.msk [vmem:[%s213 + $0x1e8] sm:$0xff] %vm439, %v416
      %473 = vst.msk [vmem:[%s213 + $0x1f0] sm:$0x1] %vm442, %v417
      %474 = vst.msk [vmem:[%s213 + $0x210] sm:$0xff] %vm439, %v418
      %475 = vst.msk [vmem:[%s213 + $0x218] sm:$0xff] %vm439, %v419
      %476 = vst.msk [vmem:[%s213 + $0x220] sm:$0x1] %vm442, %v420
      %477 = vst.msk [vmem:[%s213 + $0x240] sm:$0xff] %vm439, %v421
      %478 = vst.msk [vmem:[%s213 + $0x248] sm:$0xff] %vm439, %v422
      %479 = vst.msk [vmem:[%s213 + $0x250] sm:$0x1] %vm442, %v423
      %480 = vst.msk [vmem:[%s213 + $0x270] sm:$0xff] %vm439, %v424
      %481 = vst.msk [vmem:[%s213 + $0x278] sm:$0xff] %vm439, %v425
      %482 = vst.msk [vmem:[%s213 + $0x280] sm:$0x1] %vm442, %v426
      %483 = vst.msk [vmem:[%s213 + $0x2a0] sm:$0xff] %vm439, %v427
      %484 = vst.msk [vmem:[%s213 + $0x2a8] sm:$0xff] %vm439, %v428
      %485 = vst.msk [vmem:[%s213 + $0x2b0] sm:$0x1] %vm442, %v429
      %486 = vst.msk [vmem:[%s213 + $0x2d0] sm:$0xff] %vm439, %v430
      %487 = vst.msk [vmem:[%s213 + $0x2d8] sm:$0xff] %vm439, %v431
      %488 = vst.msk [vmem:[%s213 + $0x2e0] sm:$0x1] %vm442, %v432
      %489 = vst.msk [vmem:[%s213 + $0x300] sm:$0xff] %vm439, %v433
      %490 = vst.msk [vmem:[%s213 + $0x308] sm:$0xff] %vm439, %v434
      %491 = vst.msk [vmem:[%s213 + $0x310] sm:$0x1] %vm442, %v435
      %492 = vst.msk [vmem:[%s213 + $0x330] sm:$0xff] %vm439, %v436
      %493 = vst.msk [vmem:[%s213 + $0x338] sm:$0xff] %vm439, %v437
      %494 = vst.msk [vmem:[%s213 + $0x340] sm:$0x1] %vm442, %v438
      %549 = vrot.lane.b32.xlu0 %v385, 64
      %v550 = vpop.permute.xlu0 %549
      %551 = vrot.lane.b32.xlu0 %v386, 64
      %v552 = vpop.permute.xlu0 %551
      %553 = vrot.lane.b32.xlu0 %v387, 64
      %v554 = vpop.permute.xlu0 %553
      %555 = vrot.lane.b32.xlu0 %v388, 64
      %v556 = vpop.permute.xlu0 %555
      %557 = vrot.lane.b32.xlu0 %v389, 64
      %v558 = vpop.permute.xlu0 %557
      %559 = vrot.lane.b32.xlu0 %v390, 64
      %v560 = vpop.permute.xlu0 %559
      %561 = vrot.lane.b32.xlu0 %v391, 64
      %v562 = vpop.permute.xlu0 %561
      %563 = vrot.lane.b32.xlu0 %v392, 64
      %v564 = vpop.permute.xlu0 %563
      %565 = vrot.lane.b32.xlu0 %v393, 64
      %v566 = vpop.permute.xlu0 %565
      %567 = vrot.lane.b32.xlu0 %v394, 64
      %v568 = vpop.permute.xlu0 %567
      %569 = vrot.lane.b32.xlu0 %v395, 64
      %v570 = vpop.permute.xlu0 %569
      %571 = vrot.lane.b32.xlu0 %v396, 64
      %v572 = vpop.permute.xlu0 %571
      %573 = vrot.lane.b32.xlu0 %v397, 64
      %v574 = vpop.permute.xlu0 %573
      %575 = vrot.lane.b32.xlu0 %v398, 64
      %v576 = vpop.permute.xlu0 %575
      %577 = vrot.lane.b32.xlu0 %v399, 64
      %v578 = vpop.permute.xlu0 %577
      %579 = vrot.lane.b32.xlu0 %v400, 64
      %v580 = vpop.permute.xlu0 %579
      %581 = vrot.lane.b32.xlu0 %v401, 64
      %v582 = vpop.permute.xlu0 %581
      %583 = vrot.lane.b32.xlu0 %v402, 64
      %v584 = vpop.permute.xlu0 %583
      %585 = vrot.lane.b32.xlu0 %v403, 64
      %v586 = vpop.permute.xlu0 %585
      %587 = vrot.lane.b32.xlu0 %v404, 64
      %v588 = vpop.permute.xlu0 %587
      %589 = vrot.lane.b32.xlu0 %v405, 64
      %v590 = vpop.permute.xlu0 %589
      %591 = vrot.lane.b32.xlu0 %v406, 64
      %v592 = vpop.permute.xlu0 %591
      %593 = vrot.lane.b32.xlu0 %v407, 64
      %v594 = vpop.permute.xlu0 %593
      %595 = vrot.lane.b32.xlu0 %v408, 64
      %v596 = vpop.permute.xlu0 %595
      %597 = vrot.lane.b32.xlu0 %v409, 64
      %v598 = vpop.permute.xlu0 %597
      %599 = vrot.lane.b32.xlu0 %v410, 64
      %v600 = vpop.permute.xlu0 %599
      %601 = vrot.lane.b32.xlu0 %v411, 64
      %v602 = vpop.permute.xlu0 %601
      %603 = vrot.lane.b32.xlu0 %v412, 64
      %v604 = vpop.permute.xlu0 %603
      %605 = vrot.lane.b32.xlu0 %v413, 64
      %v606 = vpop.permute.xlu0 %605
      %607 = vrot.lane.b32.xlu0 %v414, 64
      %v608 = vpop.permute.xlu0 %607
      %609 = vrot.lane.b32.xlu0 %v415, 64
      %v610 = vpop.permute.xlu0 %609
      %611 = vrot.lane.b32.xlu0 %v416, 64
      %v612 = vpop.permute.xlu0 %611
      %613 = vrot.lane.b32.xlu0 %v417, 64
      %v614 = vpop.permute.xlu0 %613
      %615 = vrot.lane.b32.xlu0 %v418, 64
      %v616 = vpop.permute.xlu0 %615
      %617 = vrot.lane.b32.xlu0 %v419, 64
      %v618 = vpop.permute.xlu0 %617
      %619 = vrot.lane.b32.xlu0 %v420, 64
      %v620 = vpop.permute.xlu0 %619
      %621 = vrot.lane.b32.xlu0 %v421, 64
      %v622 = vpop.permute.xlu0 %621
      %623 = vrot.lane.b32.xlu0 %v422, 64
      %v624 = vpop.permute.xlu0 %623
      %625 = vrot.lane.b32.xlu0 %v423, 64
      %v626 = vpop.permute.xlu0 %625
      %627 = vrot.lane.b32.xlu0 %v424, 64
      %v628 = vpop.permute.xlu0 %627
      %629 = vrot.lane.b32.xlu0 %v425, 64
      %v630 = vpop.permute.xlu0 %629
      %631 = vrot.lane.b32.xlu0 %v426, 64
      %v632 = vpop.permute.xlu0 %631
      %633 = vrot.lane.b32.xlu0 %v427, 64
      %v634 = vpop.permute.xlu0 %633
      %635 = vrot.lane.b32.xlu0 %v428, 64
      %v636 = vpop.permute.xlu0 %635
      %637 = vrot.lane.b32.xlu0 %v429, 64
      %v638 = vpop.permute.xlu0 %637
      %639 = vrot.lane.b32.xlu0 %v430, 64
      %v640 = vpop.permute.xlu0 %639
      %641 = vrot.lane.b32.xlu0 %v431, 64
      %v642 = vpop.permute.xlu0 %641
      %643 = vrot.lane.b32.xlu0 %v432, 64
      %v644 = vpop.permute.xlu0 %643
      %645 = vrot.lane.b32.xlu0 %v433, 64
      %v646 = vpop.permute.xlu0 %645
      %647 = vrot.lane.b32.xlu0 %v434, 64
      %v648 = vpop.permute.xlu0 %647
      %649 = vrot.lane.b32.xlu0 %v435, 64
      %v650 = vpop.permute.xlu0 %649
      %651 = vrot.lane.b32.xlu0 %v436, 64
      %v652 = vpop.permute.xlu0 %651
      %653 = vrot.lane.b32.xlu0 %v437, 64
      %v654 = vpop.permute.xlu0 %653
      %655 = vrot.lane.b32.xlu0 %v438, 64
      %v656 = vpop.permute.xlu0 %655
      %s711 = scalar_lea.vmem %s213, 24
      %712 = vst.msk [vmem:[%s711] sm:$0xff] %vm439, %v550
      %713 = vst.msk [vmem:[%s711 + $0x8] sm:$0xff] %vm439, %v552
      %714 = vst.msk [vmem:[%s711 + $0x10] sm:$0x1] %vm442, %v554
      %715 = vst.msk [vmem:[%s711 + $0x30] sm:$0xff] %vm439, %v556
      %716 = vst.msk [vmem:[%s711 + $0x38] sm:$0xff] %vm439, %v558
      %717 = vst.msk [vmem:[%s711 + $0x40] sm:$0x1] %vm442, %v560
      %718 = vst.msk [vmem:[%s711 + $0x60] sm:$0xff] %vm439, %v562
      %719 = vst.msk [vmem:[%s711 + $0x68] sm:$0xff] %vm439, %v564
      %720 = vst.msk [vmem:[%s711 + $0x70] sm:$0x1] %vm442, %v566
      %721 = vst.msk [vmem:[%s711 + $0x90] sm:$0xff] %vm439, %v568
      %722 = vst.msk [vmem:[%s711 + $0x98] sm:$0xff] %vm439, %v570
      %723 = vst.msk [vmem:[%s711 + $0xa0] sm:$0x1] %vm442, %v572
      %724 = vst.msk [vmem:[%s711 + $0xc0] sm:$0xff] %vm439, %v574
      %725 = vst.msk [vmem:[%s711 + $0xc8] sm:$0xff] %vm439, %v576
      %726 = vst.msk [vmem:[%s711 + $0xd0] sm:$0x1] %vm442, %v578
      %727 = vst.msk [vmem:[%s711 + $0xf0] sm:$0xff] %vm439, %v580
      %728 = vst.msk [vmem:[%s711 + $0xf8] sm:$0xff] %vm439, %v582
      %729 = vst.msk [vmem:[%s711 + $0x100] sm:$0x1] %vm442, %v584
      %730 = vst.msk [vmem:[%s711 + $0x120] sm:$0xff] %vm439, %v586
      %731 = vst.msk [vmem:[%s711 + $0x128] sm:$0xff] %vm439, %v588
      %732 = vst.msk [vmem:[%s711 + $0x130] sm:$0x1] %vm442, %v590
      %733 = vst.msk [vmem:[%s711 + $0x150] sm:$0xff] %vm439, %v592
      %734 = vst.msk [vmem:[%s711 + $0x158] sm:$0xff] %vm439, %v594
      %735 = vst.msk [vmem:[%s711 + $0x160] sm:$0x1] %vm442, %v596
      %736 = vst.msk [vmem:[%s711 + $0x180] sm:$0xff] %vm439, %v598
      %737 = vst.msk [vmem:[%s711 + $0x188] sm:$0xff] %vm439, %v600
      %738 = vst.msk [vmem:[%s711 + $0x190] sm:$0x1] %vm442, %v602
      %739 = vst.msk [vmem:[%s711 + $0x1b0] sm:$0xff] %vm439, %v604
      %740 = vst.msk [vmem:[%s711 + $0x1b8] sm:$0xff] %vm439, %v606
      %741 = vst.msk [vmem:[%s711 + $0x1c0] sm:$0x1] %vm442, %v608
      %742 = vst.msk [vmem:[%s711 + $0x1e0] sm:$0xff] %vm439, %v610
      %743 = vst.msk [vmem:[%s711 + $0x1e8] sm:$0xff] %vm439, %v612
      %744 = vst.msk [vmem:[%s711 + $0x1f0] sm:$0x1] %vm442, %v614
      %745 = vst.msk [vmem:[%s711 + $0x210] sm:$0xff] %vm439, %v616
      %746 = vst.msk [vmem:[%s711 + $0x218] sm:$0xff] %vm439, %v618
      %747 = vst.msk [vmem:[%s711 + $0x220] sm:$0x1] %vm442, %v620
      %748 = vst.msk [vmem:[%s711 + $0x240] sm:$0xff] %vm439, %v622
      %749 = vst.msk [vmem:[%s711 + $0x248] sm:$0xff] %vm439, %v624
      %750 = vst.msk [vmem:[%s711 + $0x250] sm:$0x1] %vm442, %v626
      %751 = vst.msk [vmem:[%s711 + $0x270] sm:$0xff] %vm439, %v628
      %752 = vst.msk [vmem:[%s711 + $0x278] sm:$0xff] %vm439, %v630
      %753 = vst.msk [vmem:[%s711 + $0x280] sm:$0x1] %vm442, %v632
      %754 = vst.msk [vmem:[%s711 + $0x2a0] sm:$0xff] %vm439, %v634
      %755 = vst.msk [vmem:[%s711 + $0x2a8] sm:$0xff] %vm439, %v636
      %756 = vst.msk [vmem:[%s711 + $0x2b0] sm:$0x1] %vm442, %v638
      %757 = vst.msk [vmem:[%s711 + $0x2d0] sm:$0xff] %vm439, %v640
      %758 = vst.msk [vmem:[%s711 + $0x2d8] sm:$0xff] %vm439, %v642
      %759 = vst.msk [vmem:[%s711 + $0x2e0] sm:$0x1] %vm442, %v644
      %760 = vst.msk [vmem:[%s711 + $0x300] sm:$0xff] %vm439, %v646
      %761 = vst.msk [vmem:[%s711 + $0x308] sm:$0xff] %vm439, %v648
      %762 = vst.msk [vmem:[%s711 + $0x310] sm:$0x1] %vm442, %v650
      %763 = vst.msk [vmem:[%s711 + $0x330] sm:$0xff] %vm439, %v652
      %764 = vst.msk [vmem:[%s711 + $0x338] sm:$0xff] %vm439, %v654
      %765 = vst.msk [vmem:[%s711 + $0x340] sm:$0x1] %vm442, %v656
      %s766 = smul.u32 18, %s19
      %p767 = scmp.lt.s32.totalorder %s18, 1
      %s768 = scalar_select %p767, %s18, 1
      %p769 = scmp.lt.s32.totalorder %s766, 17
      %s770 = scalar_select %p769, %s766, 17
      %s771 = smul.addr %s770, 6
      %s772 = smul.addr %s768, 108
      %s773 = sadd.s32 %s771, %s772
      %s774 = smul.addr %s773, 8
      %s775 = scalar_lea.vmem %s3, %s774
      // Predicated region
      $region33: #{conv_up.3} parent=31 // pred_check
        %p776 = pneg %p116
      $region34: #{conv_up.3} parent=31 // pred_check_branch
        %778 = sbr.rel (%p776) target = $region36
      $region35: #{conv_up.3} parent=31 // pred_region
        %s779 = smul.u32 18, %s19
      $region36: #{conv_up.3} parent=31 // pred_fallthru
        _
    $region32: #{conv_up.3} parent=5 // pred_fallthru
      _
    %p780 = scmp.le.s32.totalorder 2, %s9
    // Predicated region
    $region37: #{conv_up.3} parent=5 // pred_check
      %p781 = pneg %p780
    $region38: #{conv_up.3} parent=5 // pred_check_branch
      %783 = sbr.rel (%p781) target = $region40
    $region39: #{conv_up.3} parent=5 // pred_region
      %s784 = ssub.s32 %s9, 2
      // Predicated region
      $region41: #{conv_up.3} parent=39 // pred_check
        %p785 = pneg %p122
      $region42: #{conv_up.3} parent=39 // pred_check_branch
        %787 = sbr.rel (%p785) target = $region44
      $region43: #{conv_up.3} parent=39 // pred_region
        %s788 = smul.u32 18, %s21
        %p789 = scmp.lt.s32.totalorder %s20, 1
        %s790 = scalar_select %p789, %s20, 1
        %p791 = scmp.lt.s32.totalorder %s788, 17
        %s792 = scalar_select %p791, %s788, 17
        %s793 = smul.addr %s792, 6
        %s794 = smul.addr %s790, 108
        %s795 = sadd.s32 %s793, %s794
        %s796 = smul.addr %s795, 8
        %s797 = scalar_lea.vmem %s3, %s796
      $region44: #{conv_up.3} parent=39 // pred_fallthru
        _
    $region40: #{conv_up.3} parent=5 // pred_fallthru
      _
  $region6: #{conv_up.3} parent=0 // loop_footer
    %s13 = sadd.s32 1, %s9
  $region7: #{conv_up.3} parent=0 // loop_footer_branch
    %8 = sbr.rel target = $region3
  $region8: #{conv_up.3} parent=0 // loop_exit
    _

// kernel: conv_up.2
$region0: #{conv_up.2}
  #allocation0 [shape = 'u32[]', space=smem, size = 0x4, offset = 0x4, fixed_abs, tag = 'smem constant byte address 0x4 - core index']
  #allocation1 [shape = 'u32[72,128]{1,0:T(1,128)}', space=vmem, size = 0x9000, scoped, tag = 'internal scratch']
  #allocation2 [shape = 'bf16[20,19,64]{2,1,0:T(8,128)(2,1)}', space=vmem, size = 0x1e000, scoped, tag = 'scratch operand']
  %s0 = inlined_call_operand.vmem [shape: bf16[2,20,19,64], index: 0, kind: input, shape index: {}, may-alias: {0,1}]
  %s1 = inlined_call_operand.vmem [shape: bf16[2,20,19,64], index: 1, kind: input, shape index: {}, may-alias: {0,1}]
  %s2 = inlined_call_operand.vmem [shape: bf16[9,64,128], index: 2, kind: input, shape index: {}]
  %s3 = inlined_call_operand.vmem [shape: bf16[2,18,17,128], index: 3, kind: output, shape index: {0}]
  %s4 = inlined_call_operand.vmem [shape: f32[2,1,1,128], index: 4, kind: output, shape index: {1}]
  %s5 = inlined_call_operand.vmem [shape: f32[2,1,1,128], index: 5, kind: output, shape index: {2}]
  %6 = xla_tuple %s3, %s4, %s5
  %s7 = sld [smem:[#allocation0]]
  $region68: #{conv_up.2} parent=0
    _
  %s9 = ssub.s32 1, %s7
  %s10 = scalar_select 0, %s9, %s7
  loop: start=0, step=1, limit=4
  $region2: #{conv_up.2} parent=0 // loop_pre_header
    _
  $region3: #{conv_up.2} parent=0 // loop_header
    %s12 = sphi 0, %s16
    %p13 = scmp.ge.s32.totalorder %s12, 4
    %s19 = sphi 0, %s31
    %s20 = sphi 0, %s27
    %s21 = sphi 0, %s19
    %s22 = sphi 0, %s20
    %s23 = sphi 0, %s21
    %s24 = sphi 0, %s22
    %s36 = sphi 0, %s38
    %s39 = sphi 0, %s36
    %s40 = sphi 0, %s39
    %s56 = sphi 0, %s40
    %s68 = sphi 0, %s70
    %s71 = sphi 0, %s68
    %s72 = sphi 0, %s71
    %s88 = sphi 0, %s72
    %s92 = sphi 0, %s92
    %s94 = sphi 0, %s92
    %s95 = sphi 0, %s94
    %s109 = sphi 0, %s95
    %s117 = sphi 0, %s119
    %s120 = sphi 0, %s117
    %s121 = sphi 0, %s120
    %s137 = sphi 0, %s121
    %s145 = sphi 0, %s147
    %s148 = sphi 0, %s145
    %s149 = sphi 0, %s148
    %s165 = sphi 0, %s149
    %s173 = sphi 0, %s175
    %s176 = sphi 0, %s173
    %s177 = sphi 0, %s176
    %s193 = sphi 0, %s177
  $region4: #{conv_up.2} parent=0 // loop_header_branch
    %15 = sbr.rel (%p13) target = $region8
  $region5: #{conv_up.2} parent=0 // loop_body
    %s17 = ssub.s32 %s12, 1
    %s18 = ssub.s32 %s12, 2
    %s25 = sadd.s32 1, %s20
    %p26 = scmp.ge.s32.totalorder %s25, 1
    %s27 = scalar_select %p26, 0, %s25
    %s28 = sadd.s32 1, %s19
    %s29 = scalar_select %p26, %s28, %s19
    %p30 = scmp.ge.s32.totalorder %s29, 2
    %s31 = scalar_select %p30, 0, %s29
    %s32 = ssub.s32 %s19, %s31
    %s33 = ssub.s32 %s20, %s27
    %s34 = sor.u32 %s32, %s33
    %p35 = scmp.eq.s32.totalorder %s34, 0
    %s37 = sadd.s32 %s36, 1
    %s38 = scalar_select %p35, %s36, %s37
    %p41 = pneg %p35
    %p42 = scmp.eq.s32.totalorder %s12, 1
    %p43 = por %p41, %p42
    %p44 = scmp.ne.s32.totalorder %s36, %s39
    %p45 = scmp.eq.s32.totalorder %s12, 0
    %p46 = por %p44, %p45
    %p47 = scmp.ne.s32.totalorder %s36, %s39
    %p48 = scmp.eq.s32.totalorder %s17, 1
    %p49 = por %p47, %p48
    %p50 = scmp.ne.s32.totalorder %s39, %s40
    %p51 = scmp.eq.s32.totalorder %s17, 0
    %p52 = por %p50, %p51
    %p53 = scmp.ne.s32.totalorder %s39, %s40
    %p54 = scmp.eq.s32.totalorder %s18, 1
    %p55 = por %p53, %p54
    %p57 = scmp.ne.s32.totalorder %s40, %s56
    %p58 = scmp.eq.s32.totalorder %s18, 0
    %p59 = por %p57, %p58
    %s60 = sadd.s32 %s20, 1
    %s61 = smul.u32 %s60, 9
    %s62 = sadd.s32 %s27, 1
    %s63 = smul.u32 %s62, 9
    %s64 = ssub.s32 %s19, %s31
    %s65 = ssub.s32 %s61, %s63
    %s66 = sor.u32 %s64, %s65
    %p67 = scmp.eq.s32.totalorder %s66, 0
    %s69 = sadd.s32 %s68, 1
    %s70 = scalar_select %p67, %s68, %s69
    %p73 = pneg %p67
    %p74 = scmp.eq.s32.totalorder %s12, 1
    %p75 = por %p73, %p74
    %p76 = scmp.ne.s32.totalorder %s68, %s71
    %p77 = scmp.eq.s32.totalorder %s12, 0
    %p78 = por %p76, %p77
    %p79 = scmp.ne.s32.totalorder %s68, %s71
    %p80 = scmp.eq.s32.totalorder %s17, 1
    %p81 = por %p79, %p80
    %p82 = scmp.ne.s32.totalorder %s71, %s72
    %p83 = scmp.eq.s32.totalorder %s17, 0
    %p84 = por %p82, %p83
    %p85 = scmp.ne.s32.totalorder %s71, %s72
    %p86 = scmp.eq.s32.totalorder %s18, 1
    %p87 = por %p85, %p86
    %p89 = scmp.ne.s32.totalorder %s72, %s88
    %p90 = scmp.eq.s32.totalorder %s18, 0
    %p91 = por %p89, %p90
    %s93 = sadd.s32 %s92, 1
    %p96 = scmp.eq.s32.totalorder %s12, 1
    %p97 = scmp.ne.s32.totalorder %s92, %s94
    %p98 = scmp.eq.s32.totalorder %s12, 0
    %p99 = por %p97, %p98
    %p100 = scmp.ne.s32.totalorder %s92, %s94
    %p101 = scmp.eq.s32.totalorder %s17, 1
    %p102 = por %p100, %p101
    %p103 = scmp.ne.s32.totalorder %s94, %s95
    %p104 = scmp.eq.s32.totalorder %s17, 0
    %p105 = por %p103, %p104
    %p106 = scmp.ne.s32.totalorder %s94, %s95
    %p107 = scmp.eq.s32.totalorder %s18, 1
    %p108 = por %p106, %p107
    %p110 = scmp.ne.s32.totalorder %s95, %s109
    %p111 = scmp.eq.s32.totalorder %s18, 0
    %p112 = por %p110, %p111
    %s113 = ssub.s32 %s19, %s31
    %s114 = ssub.s32 %s20, %s27
    %s115 = sor.u32 %s113, %s114
    %p116 = scmp.eq.s32.totalorder %s115, 0
    %s118 = sadd.s32 %s117, 1
    %s119 = scalar_select %p116, %s117, %s118
    %p122 = pneg %p116
    %p123 = scmp.eq.s32.totalorder %s12, 1
    %p124 = por %p122, %p123
    %p125 = scmp.ne.s32.totalorder %s117, %s120
    %p126 = scmp.eq.s32.totalorder %s12, 0
    %p127 = por %p125, %p126
    %p128 = scmp.ne.s32.totalorder %s117, %s120
    %p129 = scmp.eq.s32.totalorder %s17, 1
    %p130 = por %p128, %p129
    %p131 = scmp.ne.s32.totalorder %s120, %s121
    %p132 = scmp.eq.s32.totalorder %s17, 0
    %p133 = por %p131, %p132
    %p134 = scmp.ne.s32.totalorder %s120, %s121
    %p135 = scmp.eq.s32.totalorder %s18, 1
    %p136 = por %p134, %p135
    %p138 = scmp.ne.s32.totalorder %s121, %s137
    %p139 = scmp.eq.s32.totalorder %s18, 0
    %p140 = por %p138, %p139
    %s141 = ssub.s32 %s19, %s31
    %s142 = ssub.s32 %s20, %s27
    %s143 = sor.u32 %s141, %s142
    %p144 = scmp.eq.s32.totalorder %s143, 0
    %s146 = sadd.s32 %s145, 1
    %s147 = scalar_select %p144, %s145, %s146
    %p150 = pneg %p144
    %p151 = scmp.eq.s32.totalorder %s12, 1
    %p152 = por %p150, %p151
    %p153 = scmp.ne.s32.totalorder %s145, %s148
    %p154 = scmp.eq.s32.totalorder %s12, 0
    %p155 = por %p153, %p154
    %p156 = scmp.ne.s32.totalorder %s145, %s148
    %p157 = scmp.eq.s32.totalorder %s17, 1
    %p158 = por %p156, %p157
    %p159 = scmp.ne.s32.totalorder %s148, %s149
    %p160 = scmp.eq.s32.totalorder %s17, 0
    %p161 = por %p159, %p160
    %p162 = scmp.ne.s32.totalorder %s148, %s149
    %p163 = scmp.eq.s32.totalorder %s18, 1
    %p164 = por %p162, %p163
    %p166 = scmp.ne.s32.totalorder %s149, %s165
    %p167 = scmp.eq.s32.totalorder %s18, 0
    %p168 = por %p166, %p167
    %s169 = ssub.s32 %s19, %s31
    %s170 = ssub.s32 %s20, %s27
    %s171 = sor.u32 %s169, %s170
    %p172 = scmp.eq.s32.totalorder %s171, 0
    %s174 = sadd.s32 %s173, 1
    %s175 = scalar_select %p172, %s173, %s174
    %p178 = pneg %p172
    %p179 = scmp.eq.s32.totalorder %s12, 1
    %p180 = por %p178, %p179
    %p181 = scmp.ne.s32.totalorder %s173, %s176
    %p182 = scmp.eq.s32.totalorder %s12, 0
    %p183 = por %p181, %p182
    %p184 = scmp.ne.s32.totalorder %s173, %s176
    %p185 = scmp.eq.s32.totalorder %s17, 1
    %p186 = por %p184, %p185
    %p187 = scmp.ne.s32.totalorder %s176, %s177
    %p188 = scmp.eq.s32.totalorder %s17, 0
    %p189 = por %p187, %p188
    %p190 = scmp.ne.s32.totalorder %s176, %s177
    %p191 = scmp.eq.s32.totalorder %s18, 1
    %p192 = por %p190, %p191
    %p194 = scmp.ne.s32.totalorder %s177, %s193
    %p195 = scmp.eq.s32.totalorder %s18, 0
    %p196 = por %p194, %p195
    %p197 = scmp.le.s32.totalorder 1, %s12
    %p198 = scmp.lt.s32.totalorder %s12, 3
    %p199 = pnand %p197, %p198
    %p200 = pneg %p199
    // Predicated region
    $region9: #{conv_up.2} parent=5 // pred_check
      _
    $region10: #{conv_up.2} parent=5 // pred_check_branch
      %202 = sbr.rel (%p199) target = $region12
    $region11: #{conv_up.2} parent=5 // pred_region
      %s203 = ssub.s32 %s12, 1
      // Predicated region
      $region13: #{conv_up.2} parent=11 // pred_check
        %p204 = pneg %p105
      $region14: #{conv_up.2} parent=11 // pred_check_branch
        %206 = sbr.rel (%p204) target = $region16
      $region15: #{conv_up.2} parent=11 // pred_region
        _
      $region16: #{conv_up.2} parent=11 // pred_fallthru
        _
    $region12: #{conv_up.2} parent=5 // pred_fallthru
      _
    %p207 = scmp.lt.s32.totalorder %s12, 2
    // Predicated region
    $region17: #{conv_up.2} parent=5 // pred_check
      %p208 = pneg %p207
    $region18: #{conv_up.2} parent=5 // pred_check_branch
      %210 = sbr.rel (%p208) target = $region20
    $region19: #{conv_up.2} parent=5 // pred_region
      // Predicated region
      $region21: #{conv_up.2} parent=19 // pred_check
        %p211 = pneg %p46
      $region22: #{conv_up.2} parent=19 // pred_check_branch
        %213 = sbr.rel (%p211) target = $region24
      $region23: #{conv_up.2} parent=19 // pred_region
        %s214 = smul.u32 18, %s20
        %s215 = ssub.s32 20, %s214
        %p216 = scmp.lt.s32.totalorder %s215, 18
        %s217 = scalar_select %p216, %s215, 18
        %s218 = smul.u32 4, %s217
        %s219 = smul.u32 %s218, 3
        %p220 = scmp.lt.s32.totalorder %s19, 1
        %s221 = scalar_select %p220, %s19, 1
        %p222 = scmp.lt.s32.totalorder %s214, 19
        %s223 = scalar_select %p222, %s214, 19
        %s224 = smul.addr %s223, 3
        %s225 = smul.addr %s221, 60
        %s226 = sadd.s32 %s224, %s225
        %s227 = smul.addr %s226, 4
        %s228 = scalar_lea.vmem %s0, %s227
        %s229 = smul.u32 18, %s20
        %s230 = ssub.s32 20, %s229
        %p231 = scmp.lt.s32.totalorder %s230, 18
        %s232 = scalar_select %p231, %s230, 18
        %s233 = smul.u32 4, %s232
        %s234 = smul.u32 %s233, 3
      $region24: #{conv_up.2} parent=19 // pred_fallthru
        _
      // Predicated region
      $region25: #{conv_up.2} parent=19 // pred_check
        %p235 = pneg %p78
      $region26: #{conv_up.2} parent=19 // pred_check_branch
        %237 = sbr.rel (%p235) target = $region28
      $region27: #{conv_up.2} parent=19 // pred_region
        %s238 = sadd.s32 %s20, 1
        %s239 = smul.u32 %s238, 9
        %s240 = smul.u32 2, %s239
        %p241 = scmp.lt.s32.totalorder %s19, 1
        %s242 = scalar_select %p241, %s19, 1
        %p243 = scmp.lt.s32.totalorder %s240, 19
        %s244 = scalar_select %p243, %s240, 19
        %s245 = smul.addr %s244, 3
        %s246 = smul.addr %s242, 60
        %s247 = sadd.s32 %s245, %s246
        %s248 = smul.addr %s247, 4
        %s249 = scalar_lea.vmem %s1, %s248
        %s250 = sadd.s32 %s20, 1
        %s251 = smul.u32 %s250, 9
        %s252 = smul.u32 2, %s251
      $region28: #{conv_up.2} parent=19 // pred_fallthru
        _
    $region20: #{conv_up.2} parent=5 // pred_fallthru
      _
    %p253 = scmp.le.s32.totalorder 1, %s12
    %p254 = scmp.lt.s32.totalorder %s12, 3
    %p255 = pnand %p253, %p254
    %p256 = pneg %p255
    // Predicated region
    $region29: #{conv_up.2} parent=5 // pred_check
      _
    $region30: #{conv_up.2} parent=5 // pred_check_branch
      %258 = sbr.rel (%p255) target = $region32
    $region31: #{conv_up.2} parent=5 // pred_region
      %s259 = ssub.s32 %s12, 1
      %s260 = smul.u32 18, %s22
      %s261 = ssub.s32 20, %s260
      %p262 = scmp.lt.s32.totalorder %s261, 18
      %s263 = scalar_select %p262, %s261, 18
      %s264 = smul.u32 4, %s263
      %s265 = smul.u32 %s264, 3
      %p266 = scmp.lt.s32.totalorder %s21, 1
      %s267 = scalar_select %p266, %s21, 1
      %p268 = scmp.lt.s32.totalorder %s260, 19
      %s269 = scalar_select %p268, %s260, 19
      %s270 = smul.addr %s269, 3
      %s271 = smul.addr %s267, 60
      %s272 = sadd.s32 %s270, %s271
      %s273 = smul.addr %s272, 4
      %s274 = scalar_lea.vmem %s0, %s273
      %p275 = pneg %p52
      %p276 = pneg %p49
      %s277 = sadd.s32 %s22, 1
      %s278 = smul.u32 %s277, 9
      %s279 = smul.u32 2, %s278
      %p280 = scmp.lt.s32.totalorder %s21, 1
      %s281 = scalar_select %p280, %s21, 1
      %p282 = scmp.lt.s32.totalorder %s279, 19
      %s283 = scalar_select %p282, %s279, 19
      %s284 = smul.addr %s283, 3
      %s285 = smul.addr %s281, 60
      %s286 = sadd.s32 %s284, %s285
      %s287 = smul.addr %s286, 4
      %s288 = scalar_lea.vmem %s1, %s287
      %p289 = pneg %p84
      %p290 = pneg %p81
      %p291 = pneg %p105
      %p292 = pneg %p102
      %p293 = pneg %p133
      %p294 = pneg %p130
      %s295 = smul.u32 18, %s22
      %p296 = scmp.lt.s32.totalorder %s21, 1
      %s297 = scalar_select %p296, %s21, 1
      %p298 = scmp.lt.s32.totalorder %s295, 17
      %s299 = scalar_select %p298, %s295, 17
      %s300 = smul.addr %s299, 3
      %s301 = smul.addr %s297, 54
      %s302 = sadd.s32 %s300, %s301
      %s303 = smul.addr %s302, 4
      %s304 = scalar_lea.vmem %s3, %s303
      %p305 = pneg %p161
      %p306 = pneg %p158
      %p307 = scmp.lt.s32.totalorder %s21, 1
      %s308 = scalar_select %p307, %s21, 1
      %p309 = scmp.lt.s32.totalorder %s22, 0
      %s310 = scalar_select %p309, %s22, 0
      %s311 = sadd.s32 %s310, %s308
      %s312 = scalar_lea.vmem %s4, %s311
      %p313 = pneg %p189
      %p314 = pneg %p186
      %p315 = scmp.lt.s32.totalorder %s21, 1
      %s316 = scalar_select %p315, %s21, 1
      %p317 = scmp.lt.s32.totalorder %s22, 0
      %s318 = scalar_select %p317, %s22, 0
      %s319 = sadd.s32 %s318, %s316
      %s320 = scalar_lea.vmem %s5, %s319
      %s321 = smul.u32 18, %s22
      %s322 = ssub.s32 20, %s321
      %p323 = scmp.lt.s32.totalorder %s322, 18
      %s324 = scalar_select %p323, %s322, 18
      %s325 = smul.u32 4, %s324
      %s326 = smul.u32 %s325, 3
      %p327 = scmp.lt.s32.totalorder %s21, 1
      %s328 = scalar_select %p327, %s21, 1
      %p329 = scmp.lt.s32.totalorder %s321, 19
      %s330 = scalar_select %p329, %s321, 19
      %s331 = smul.addr %s330, 3
      %s332 = smul.addr %s328, 60
      %s333 = sadd.s32 %s331, %s332
      %s334 = smul.addr %s333, 4
      %s335 = scalar_lea.vmem %s0, %s334
      %s336 = smul.u32 18, %s22
      %s337 = ssub.s32 20, %s336
      %p338 = scmp.lt.s32.totalorder %s337, 18
      %s339 = scalar_select %p338, %s337, 18
      %s340 = smul.u32 4, %s339
      %s341 = smul.u32 %s340, 3
      %s342 = sadd.s32 %s22, 1
      %s343 = smul.u32 %s342, 9
      %s344 = smul.u32 2, %s343
      %p345 = scmp.lt.s32.totalorder %s21, 1
      %s346 = scalar_select %p345, %s21, 1
      %p347 = scmp.lt.s32.totalorder %s344, 19
      %s348 = scalar_select %p347, %s344, 19
      %s349 = smul.addr %s348, 3
      %s350 = smul.addr %s346, 60
      %s351 = sadd.s32 %s349, %s350
      %s352 = smul.addr %s351, 4
      %s353 = scalar_lea.vmem %s1, %s352
      %s354 = sadd.s32 %s22, 1
      %s355 = smul.u32 %s354, 9
      %s356 = smul.u32 2, %s355
      %s357 = smul.u32 18, %s22
      %p358 = scmp.lt.s32.totalorder %s21, 1
      %s359 = scalar_select %p358, %s21, 1
      %p360 = scmp.lt.s32.totalorder %s357, 17
      %s361 = scalar_select %p360, %s357, 17
      %s362 = smul.addr %s361, 3
      %s363 = smul.addr %s359, 54
      %s364 = sadd.s32 %s362, %s363
      %s365 = smul.addr %s364, 4
      %s366 = scalar_lea.vmem %s3, %s365
      %s367 = smul.u32 18, %s22
      %p368 = scmp.lt.s32.totalorder %s21, 1
      %s369 = scalar_select %p368, %s21, 1
      %p370 = scmp.lt.s32.totalorder %s22, 0
      %s371 = scalar_select %p370, %s22, 0
      %s372 = sadd.s32 %s371, %s369
      %s373 = scalar_lea.vmem %s4, %s372
      %p374 = scmp.lt.s32.totalorder %s21, 1
      %s375 = scalar_select %p374, %s21, 1
      %p376 = scmp.lt.s32.totalorder %s22, 0
      %s377 = scalar_select %p376, %s22, 0
      %s378 = sadd.s32 %s377, %s375
      %s379 = scalar_lea.vmem %s5, %s378
      %v381 = vld [vmem:[%s335] sm:$0xf]
      %v382 = vld [vmem:[%s335 + $0x4] sm:$0xf]
      %v383 = vld [vmem:[%s335 + $0x8] sm:$0x3]
      %v384 = vld [vmem:[%s335 + $0xc] sm:$0xf]
      %v385 = vld [vmem:[%s335 + $0x10] sm:$0xf]
      %v386 = vld [vmem:[%s335 + $0x14] sm:$0x3]
      %v387 = vld [vmem:[%s335 + $0x18] sm:$0xf]
      %v388 = vld [vmem:[%s335 + $0x1c] sm:$0xf]
      %v389 = vld [vmem:[%s335 + $0x20] sm:$0x3]
      %v390 = vld [vmem:[%s335 + $0x24] sm:$0xf]
      %v391 = vld [vmem:[%s335 + $0x28] sm:$0xf]
      %v392 = vld [vmem:[%s335 + $0x2c] sm:$0x3]
      %v393 = vld [vmem:[%s335 + $0x30] sm:$0xf]
      %v394 = vld [vmem:[%s335 + $0x34] sm:$0xf]
      %v395 = vld [vmem:[%s335 + $0x38] sm:$0x3]
      %v396 = vld [vmem:[%s335 + $0x3c] sm:$0xf]
      %v397 = vld [vmem:[%s335 + $0x40] sm:$0xf]
      %v398 = vld [vmem:[%s335 + $0x44] sm:$0x3]
      %v399 = vld [vmem:[%s335 + $0x48] sm:$0xf]
      %v400 = vld [vmem:[%s335 + $0x4c] sm:$0xf]
      %v401 = vld [vmem:[%s335 + $0x50] sm:$0x3]
      %v402 = vld [vmem:[%s335 + $0x54] sm:$0xf]
      %v403 = vld [vmem:[%s335 + $0x58] sm:$0xf]
      %v404 = vld [vmem:[%s335 + $0x5c] sm:$0x3]
      %v405 = vld [vmem:[%s335 + $0x60] sm:$0xf]
      %v406 = vld [vmem:[%s335 + $0x64] sm:$0xf]
      %v407 = vld [vmem:[%s335 + $0x68] sm:$0x3]
      %v408 = vld [vmem:[%s335 + $0x6c] sm:$0xf]
      %v409 = vld [vmem:[%s335 + $0x70] sm:$0xf]
      %v410 = vld [vmem:[%s335 + $0x74] sm:$0x3]
      %v411 = vld [vmem:[%s335 + $0x78] sm:$0xf]
      %v412 = vld [vmem:[%s335 + $0x7c] sm:$0xf]
      %v413 = vld [vmem:[%s335 + $0x80] sm:$0x3]
      %v414 = vld [vmem:[%s335 + $0x84] sm:$0xf]
      %v415 = vld [vmem:[%s335 + $0x88] sm:$0xf]
      %v416 = vld [vmem:[%s335 + $0x8c] sm:$0x3]
      %v417 = vld [vmem:[%s335 + $0x90] sm:$0xf]
      %v418 = vld [vmem:[%s335 + $0x94] sm:$0xf]
      %v419 = vld [vmem:[%s335 + $0x98] sm:$0x3]
      %v420 = vld [vmem:[%s335 + $0x9c] sm:$0xf]
      %v421 = vld [vmem:[%s335 + $0xa0] sm:$0xf]
      %v422 = vld [vmem:[%s335 + $0xa4] sm:$0x3]
      %v423 = vld [vmem:[%s335 + $0xa8] sm:$0xf]
      %v424 = vld [vmem:[%s335 + $0xac] sm:$0xf]
      %v425 = vld [vmem:[%s335 + $0xb0] sm:$0x3]
      %v426 = vld [vmem:[%s335 + $0xb4] sm:$0xf]
      %v427 = vld [vmem:[%s335 + $0xb8] sm:$0xf]
      %v428 = vld [vmem:[%s335 + $0xbc] sm:$0x3]
      %v429 = vld [vmem:[%s335 + $0xc0] sm:$0xf]
      %v430 = vld [vmem:[%s335 + $0xc4] sm:$0xf]
      %v431 = vld [vmem:[%s335 + $0xc8] sm:$0x3]
      %v432 = vld [vmem:[%s335 + $0xcc] sm:$0xf]
      %v433 = vld [vmem:[%s335 + $0xd0] sm:$0xf]
      %v434 = vld [vmem:[%s335 + $0xd4] sm:$0x3]
      %vm435 = vcmask 519168
      %436 = vst.msk [vmem:[#allocation2] sm:$0xf] %vm435, %v381
      %437 = vst.msk [vmem:[#allocation2 + $0x4] sm:$0xf] %vm435, %v382
      %vm438 = vcmask 517120
      %vm439 = vsmask.f32 1280
      %vm440 = vmand %vm438, %vm439
      %v441 = vld [vmem:[#allocation2 + $0x8] sm:$0x3]
      %v442 = vsel %vm440, %v383, %v441
      %443 = vst [vmem:[#allocation2 + $0x8] sm:$0x3] %v442
      %444 = vst.msk [vmem:[#allocation2 + $0xc] sm:$0xf] %vm435, %v384
      %445 = vst.msk [vmem:[#allocation2 + $0x10] sm:$0xf] %vm435, %v385
      %v446 = vld [vmem:[#allocation2 + $0x14] sm:$0x3]
      %v447 = vsel %vm440, %v386, %v446
      %448 = vst [vmem:[#allocation2 + $0x14] sm:$0x3] %v447
      %449 = vst.msk [vmem:[#allocation2 + $0x18] sm:$0xf] %vm435, %v387
      %450 = vst.msk [vmem:[#allocation2 + $0x1c] sm:$0xf] %vm435, %v388
      %v451 = vld [vmem:[#allocation2 + $0x20] sm:$0x3]
      %v452 = vsel %vm440, %v389, %v451
      %453 = vst [vmem:[#allocation2 + $0x20] sm:$0x3] %v452
      %454 = vst.msk [vmem:[#allocation2 + $0x24] sm:$0xf] %vm435, %v390
      %455 = vst.msk [vmem:[#allocation2 + $0x28] sm:$0xf] %vm435, %v391
      %v456 = vld [vmem:[#allocation2 + $0x2c] sm:$0x3]
      %v457 = vsel %vm440, %v392, %v456
      %458 = vst [vmem:[#allocation2 + $0x2c] sm:$0x3] %v457
      %459 = vst.msk [vmem:[#allocation2 + $0x30] sm:$0xf] %vm435, %v393
      %460 = vst.msk [vmem:[#allocation2 + $0x34] sm:$0xf] %vm435, %v394
      %v461 = vld [vmem:[#allocation2 + $0x38] sm:$0x3]
      %v462 = vsel %vm440, %v395, %v461
      %463 = vst [vmem:[#allocation2 + $0x38] sm:$0x3] %v462
      %464 = vst.msk [vmem:[#allocation2 + $0x3c] sm:$0xf] %vm435, %v396
      %465 = vst.msk [vmem:[#allocation2 + $0x40] sm:$0xf] %vm435, %v397
      %v466 = vld [vmem:[#allocation2 + $0x44] sm:$0x3]
      %v467 = vsel %vm440, %v398, %v466
      %468 = vst [vmem:[#allocation2 + $0x44] sm:$0x3] %v467
      %469 = vst.msk [vmem:[#allocation2 + $0x48] sm:$0xf] %vm435, %v399
      %470 = vst.msk [vmem:[#allocation2 + $0x4c] sm:$0xf] %vm435, %v400
      %v471 = vld [vmem:[#allocation2 + $0x50] sm:$0x3]
      %v472 = vsel %vm440, %v401, %v471
      %473 = vst [vmem:[#allocation2 + $0x50] sm:$0x3] %v472
      %474 = vst.msk [vmem:[#allocation2 + $0x54] sm:$0xf] %vm435, %v402
      %475 = vst.msk [vmem:[#allocation2 + $0x58] sm:$0xf] %vm435, %v403
      %v476 = vld [vmem:[#allocation2 + $0x5c] sm:$0x3]
      %v477 = vsel %vm440, %v404, %v476
      %478 = vst [vmem:[#allocation2 + $0x5c] sm:$0x3] %v477
      %479 = vst.msk [vmem:[#allocation2 + $0x60] sm:$0xf] %vm435, %v405
      %480 = vst.msk [vmem:[#allocation2 + $0x64] sm:$0xf] %vm435, %v406
      %v481 = vld [vmem:[#allocation2 + $0x68] sm:$0x3]
      %v482 = vsel %vm440, %v407, %v481
      %483 = vst [vmem:[#allocation2 + $0x68] sm:$0x3] %v482
      %484 = vst.msk [vmem:[#allocation2 + $0x6c] sm:$0xf] %vm435, %v408
      %485 = vst.msk [vmem:[#allocation2 + $0x70] sm:$0xf] %vm435, %v409
      %v486 = vld [vmem:[#allocation2 + $0x74] sm:$0x3]
      %v487 = vsel %vm440, %v410, %v486
      %488 = vst [vmem:[#allocation2 + $0x74] sm:$0x3] %v487
      %489 = vst.msk [vmem:[#allocation2 + $0x78] sm:$0xf] %vm435, %v411
      %490 = vst.msk [vmem:[#allocation2 + $0x7c] sm:$0xf] %vm435, %v412
      %v491 = vld [vmem:[#allocation2 + $0x80] sm:$0x3]
      %v492 = vsel %vm440, %v413, %v491
      %493 = vst [vmem:[#allocation2 + $0x80] sm:$0x3] %v492
      %494 = vst.msk [vmem:[#allocation2 + $0x84] sm:$0xf] %vm435, %v414
      %495 = vst.msk [vmem:[#allocation2 + $0x88] sm:$0xf] %vm435, %v415
      %v496 = vld [vmem:[#allocation2 + $0x8c] sm:$0x3]
      %v497 = vsel %vm440, %v416, %v496
      %498 = vst [vmem:[#allocation2 + $0x8c] sm:$0x3] %v497
      %499 = vst.msk [vmem:[#allocation2 + $0x90] sm:$0xf] %vm435, %v417
      %500 = vst.msk [vmem:[#allocation2 + $0x94] sm:$0xf] %vm435, %v418
      %v501 = vld [vmem:[#allocation2 + $0x98] sm:$0x3]
      %v502 = vsel %vm440, %v419, %v501
      %503 = vst [vmem:[#allocation2 + $0x98] sm:$0x3] %v502
      %504 = vst.msk [vmem:[#allocation2 + $0x9c] sm:$0xf] %vm435, %v420
      %505 = vst.msk [vmem:[#allocation2 + $0xa0] sm:$0xf] %vm435, %v421
      %v506 = vld [vmem:[#allocation2 + $0xa4] sm:$0x3]
      %v507 = vsel %vm440, %v422, %v506
      %508 = vst [vmem:[#allocation2 + $0xa4] sm:$0x3] %v507
      %509 = vst.msk [vmem:[#allocation2 + $0xa8] sm:$0xf] %vm435, %v423
      %510 = vst.msk [vmem:[#allocation2 + $0xac] sm:$0xf] %vm435, %v424
      %v511 = vld [vmem:[#allocation2 + $0xb0] sm:$0x3]
      %v512 = vsel %vm440, %v425, %v511
      %513 = vst [vmem:[#allocation2 + $0xb0] sm:$0x3] %v512
      %514 = vst.msk [vmem:[#allocation2 + $0xb4] sm:$0xf] %vm435, %v426
      %515 = vst.msk [vmem:[#allocation2 + $0xb8] sm:$0xf] %vm435, %v427
      %v516 = vld [vmem:[#allocation2 + $0xbc] sm:$0x3]
      %v517 = vsel %vm440, %v428, %v516
      %518 = vst [vmem:[#allocation2 + $0xbc] sm:$0x3] %v517
      %519 = vst.msk [vmem:[#allocation2 + $0xc0] sm:$0xf] %vm435, %v429
      %520 = vst.msk [vmem:[#allocation2 + $0xc4] sm:$0xf] %vm435, %v430
      %v521 = vld [vmem:[#allocation2 + $0xc8] sm:$0x3]
      %v522 = vsel %vm440, %v431, %v521
      %523 = vst [vmem:[#allocation2 + $0xc8] sm:$0x3] %v522
      %524 = vst.msk [vmem:[#allocation2 + $0xcc] sm:$0xf] %vm435, %v432
      %525 = vst.msk [vmem:[#allocation2 + $0xd0] sm:$0xf] %vm435, %v433
      %v526 = vld [vmem:[#allocation2 + $0xd4] sm:$0x3]
      %v527 = vsel %vm440, %v434, %v526
      %528 = vst [vmem:[#allocation2 + $0xd4] sm:$0x3] %v527
      %v529 = vld [vmem:[%s353] sm:$0xf]
      %v530 = vld [vmem:[%s353 + $0x4] sm:$0xf]
      %v531 = vld [vmem:[%s353 + $0x8] sm:$0x3]
      %v532 = vld [vmem:[%s353 + $0xc] sm:$0xf]
      %v533 = vld [vmem:[%s353 + $0x10] sm:$0xf]
      %v534 = vld [vmem:[%s353 + $0x14] sm:$0x3]
      %s535 = scalar_lea.vmem [#allocation2], 216
      %536 = vst.msk [vmem:[%s535] sm:$0xf] %vm435, %v529
      %537 = vst.msk [vmem:[%s535 + $0x4] sm:$0xf] %vm435, %v530
      %v538 = vld [vmem:[%s535 + $0x8] sm:$0x3]
      %v539 = vsel %vm440, %v531, %v538
      %540 = vst [vmem:[%s535 + $0x8] sm:$0x3] %v539
      %541 = vst.msk [vmem:[%s535 + $0xc] sm:$0xf] %vm435, %v532
      %542 = vst.msk [vmem:[%s535 + $0x10] sm:$0xf] %vm435, %v533
      %v543 = vld [vmem:[%s535 + $0x14] sm:$0x3]
      %v544 = vsel %vm440, %v534, %v543
      %545 = vst [vmem:[%s535 + $0x14] sm:$0x3] %v544
      loop: start=0, step=1, limit=18
      $region33: #{conv_up.2} parent=31 // loop_pre_header
        _
      $region34: #{conv_up.2} parent=31 // loop_header
        %s547 = sphi 0, %s551
        %p548 = scmp.ge.s32.totalorder %s547, 18
        %v552 = vphi 0.0, %v1205
        %v553 = vphi 0.0, %v1218
      $region35: #{conv_up.2} parent=31 // loop_header_branch
        %550 = sbr.rel (%p548) target = $region39
      $region36: #{conv_up.2} parent=31 // loop_body
        %s554 = smul.u32 %s547, 3
        %s555 = smul.addr %s554, 4
        %s556 = scalar_lea.vmem [#allocation2], %s555
        %v557 = vld [vmem:[%s556] sm:$0xf]
        %v558 = vld [vmem:[%s556 + $0x4] sm:$0xf]
        %v559 = vld [vmem:[%s556 + $0x8] sm:$0x3]
        %v560 = vld [vmem:[%s2] sm:$0xf]
        %v561 = vld [vmem:[%s2 + $0x4] sm:$0xf]
        %v562 = vld [vmem:[%s2 + $0x8] sm:$0xf]
        %v563 = vld [vmem:[%s2 + $0xc] sm:$0xf]
        %v564 = vld [vmem:[%s2 + $0x10] sm:$0xf]
        %v565 = vld [vmem:[%s2 + $0x14] sm:$0xf]
        %v566 = vld [vmem:[%s2 + $0x18] sm:$0xf]
        %v567 = vld [vmem:[%s2 + $0x1c] sm:$0xf]
        %s568 = scalar_lea.vmem %s2, 32
        %v569 = vld [vmem:[%s568] sm:$0xf]
        %v570 = vld [vmem:[%s568 + $0x4] sm:$0xf]
        %v571 = vld [vmem:[%s568 + $0x8] sm:$0xf]
        %v572 = vld [vmem:[%s568 + $0xc] sm:$0xf]
        %v573 = vld [vmem:[%s568 + $0x10] sm:$0xf]
        %v574 = vld [vmem:[%s568 + $0x14] sm:$0xf]
        %v575 = vld [vmem:[%s568 + $0x18] sm:$0xf]
        %v576 = vld [vmem:[%s568 + $0x1c] sm:$0xf]
        %v580 = vunpack.c.l.b16 %v557
        %v581 = vunpack.c.l.b16 %v558
        %v582 = vunpack.c.l.b16 %v559
        %v583 = vpack.c.b16 %v581, %v580
        %v584 = vpack.c.b16 %v582, %v582
        %vm585 = vsmask.f32 7424
        %v587 = vshrl.u32 %v583, 16
        %v589 = vshll.u32 %v583, 16
        %v591 = vrot.slane %v589, 1
        %v592 = vor.u32 %v587, %v591
        %v594 = vshll.u32 %v584, 16
        %v596 = vrot.slane %v594, 1
        %v597 = vsel %vm585, %v592, %v596
        %v598 = vshrl.u32 %v584, 16
        %v608 = vunpack.c.l.b16 %v569
        %v609 = vunpack.c.l.b16 %v570
        %v610 = vunpack.c.l.b16 %v571
        %v611 = vunpack.c.l.b16 %v572
        %v612 = vunpack.c.l.b16 %v573
        %v613 = vunpack.c.l.b16 %v574
        %v614 = vunpack.c.l.b16 %v575
        %v615 = vunpack.c.l.b16 %v576
        %v616 = vpack.c.b16 %v609, %v608
        %v617 = vpack.c.b16 %v611, %v610
        %v618 = vpack.c.b16 %v613, %v612
        %v619 = vpack.c.b16 %v615, %v614
        %vm624 = vcmask 523264
        %v626 = vsel %vm624, %v597, 0
        %v629 = vsel %vm624, %v598, 0
        %631 = vmatpush.bf16.msra.mxu0 0
        %632 = vmatpush.bf16.msra.mxu0 0
        %633 = vmatpush.bf16.msra.mxu0 0
        %634 = vmatpush.bf16.msra.mxu0 0
        %635 = vmatpush.bf16.msra.mxu0 %v619
        %636 = vmatpush.bf16.msra.mxu0 %v618
        %637 = vmatpush.bf16.msra.mxu0 %v617
        %638 = vmatpush.bf16.msra.mxu0 %v616
        %639 = vmatmul.bf16.gmra.mxu0 %v626
        %v640 = vpop.f32.mrf.mxu0
        %v641 = vadd.f32 0.0, %v640
        %v642 = vpop.f32.mrf.mxu0
        %v643 = vadd.f32 0.0, %v642
        %644 = vmatmul.bf16.gmra.mxu0 %v629
        %v645 = vpop.f32.mrf.mxu0
        %v646 = vadd.f32 0.0, %v645
        %v647 = vpop.f32.mrf.mxu0
        %648 = vdwg.mxu0
        %v657 = vunpack.c.l.b16 %v560
        %v658 = vunpack.c.l.b16 %v561
        %v659 = vunpack.c.l.b16 %v562
        %v660 = vunpack.c.l.b16 %v563
        %v661 = vunpack.c.l.b16 %v564
        %v662 = vunpack.c.l.b16 %v565
        %v663 = vunpack.c.l.b16 %v566
        %v664 = vunpack.c.l.b16 %v567
        %v665 = vpack.c.b16 %v658, %v657
        %v666 = vpack.c.b16 %v660, %v659
        %v667 = vpack.c.b16 %v662, %v661
        %v668 = vpack.c.b16 %v664, %v663
        %v673 = vsel %vm624, %v583, 0
        %v675 = vsel %vm624, %v584, 0
        %677 = vmatpush.bf16.msra.mxu0 0
        %678 = vmatpush.bf16.msra.mxu0 0
        %679 = vmatpush.bf16.msra.mxu0 0
        %680 = vmatpush.bf16.msra.mxu0 0
        %681 = vmatpush.bf16.msra.mxu0 %v668
        %682 = vmatpush.bf16.msra.mxu0 %v667
        %683 = vmatpush.bf16.msra.mxu0 %v666
        %684 = vmatpush.bf16.msra.mxu0 %v665
        %685 = vmatmul.bf16.gmra.mxu0 %v673
        %v686 = vpop.f32.mrf.mxu0
        %v687 = vadd.f32 %v641, %v686
        %v688 = vpop.f32.mrf.mxu0
        %v689 = vadd.f32 %v643, %v688
        %690 = vmatmul.bf16.gmra.mxu0 %v675
        %v691 = vpop.f32.mrf.mxu0
        %v692 = vadd.f32 %v646, %v691
        %v693 = vpop.f32.mrf.mxu0
        %694 = vdwg.mxu0
        %s695 = scalar_lea.vmem %s2, 64
        %v696 = vld [vmem:[%s695] sm:$0xf]
        %v697 = vld [vmem:[%s695 + $0x4] sm:$0xf]
        %v698 = vld [vmem:[%s695 + $0x8] sm:$0xf]
        %v699 = vld [vmem:[%s695 + $0xc] sm:$0xf]
        %v700 = vld [vmem:[%s695 + $0x10] sm:$0xf]
        %v701 = vld [vmem:[%s695 + $0x14] sm:$0xf]
        %v702 = vld [vmem:[%s695 + $0x18] sm:$0xf]
        %v703 = vld [vmem:[%s695 + $0x1c] sm:$0xf]
        %vm704 = vcmask 1046528
        %v705 = vrot.slane %v583, 1
        %v706 = vrot.slane %v584, 1
        %v707 = vsel %vm704, %v705, %v706
        %v716 = vunpack.c.l.b16 %v696
        %v717 = vunpack.c.l.b16 %v697
        %v718 = vunpack.c.l.b16 %v698
        %v719 = vunpack.c.l.b16 %v699
        %v720 = vunpack.c.l.b16 %v700
        %v721 = vunpack.c.l.b16 %v701
        %v722 = vunpack.c.l.b16 %v702
        %v723 = vunpack.c.l.b16 %v703
        %v724 = vpack.c.b16 %v717, %v716
        %v725 = vpack.c.b16 %v719, %v718
        %v726 = vpack.c.b16 %v721, %v720
        %v727 = vpack.c.b16 %v723, %v722
        %v733 = vsel %vm624, %v707, 0
        %v736 = vsel %vm624, %v706, 0
        %738 = vmatpush.bf16.msra.mxu0 0
        %739 = vmatpush.bf16.msra.mxu0 0
        %740 = vmatpush.bf16.msra.mxu0 0
        %741 = vmatpush.bf16.msra.mxu0 0
        %742 = vmatpush.bf16.msra.mxu0 %v727
        %743 = vmatpush.bf16.msra.mxu0 %v726
        %744 = vmatpush.bf16.msra.mxu0 %v725
        %745 = vmatpush.bf16.msra.mxu0 %v724
        %746 = vmatmul.bf16.gmra.mxu0 %v733
        %v747 = vpop.f32.mrf.mxu0
        %v748 = vadd.f32 0.0, %v747
        %v749 = vpop.f32.mrf.mxu0
        %v750 = vadd.f32 0.0, %v749
        %751 = vmatmul.bf16.gmra.mxu0 %v736
        %v752 = vpop.f32.mrf.mxu0
        %v753 = vadd.f32 0.0, %v752
        %v754 = vpop.f32.mrf.mxu0
        %755 = vdwg.mxu0
        %v756 = vadd.f32 %v687, %v748
        %v757 = vadd.f32 %v689, %v750
        %v758 = vadd.f32 %v692, %v753
        %s759 = sadd.s32 %s547, 1
        %s760 = smul.u32 %s759, 3
        %s761 = smul.addr %s760, 4
        %s762 = scalar_lea.vmem [#allocation2], %s761
        %v763 = vld [vmem:[%s762] sm:$0xf]
        %v764 = vld [vmem:[%s762 + $0x4] sm:$0xf]
        %v765 = vld [vmem:[%s762 + $0x8] sm:$0x3]
        %s766 = scalar_lea.vmem %s2, 96
        %v767 = vld [vmem:[%s766] sm:$0xf]
        %v768 = vld [vmem:[%s766 + $0x4] sm:$0xf]
        %v769 = vld [vmem:[%s766 + $0x8] sm:$0xf]
        %v770 = vld [vmem:[%s766 + $0xc] sm:$0xf]
        %v771 = vld [vmem:[%s766 + $0x10] sm:$0xf]
        %v772 = vld [vmem:[%s766 + $0x14] sm:$0xf]
        %v773 = vld [vmem:[%s766 + $0x18] sm:$0xf]
        %v774 = vld [vmem:[%s766 + $0x1c] sm:$0xf]
        %v778 = vunpack.c.l.b16 %v763
        %v779 = vunpack.c.l.b16 %v764
        %v780 = vunpack.c.l.b16 %v765
        %v781 = vpack.c.b16 %v779, %v778
        %v782 = vpack.c.b16 %v780, %v780
        %v791 = vunpack.c.l.b16 %v767
        %v792 = vunpack.c.l.b16 %v768
        %v793 = vunpack.c.l.b16 %v769
        %v794 = vunpack.c.l.b16 %v770
        %v795 = vunpack.c.l.b16 %v771
        %v796 = vunpack.c.l.b16 %v772
        %v797 = vunpack.c.l.b16 %v773
        %v798 = vunpack.c.l.b16 %v774
        %v799 = vpack.c.b16 %v792, %v791
        %v800 = vpack.c.b16 %v794, %v793
        %v801 = vpack.c.b16 %v796, %v795
        %v802 = vpack.c.b16 %v798, %v797
        %v808 = vsel %vm624, %v781, 0
        %v811 = vsel %vm624, %v782, 0
        %813 = vmatpush.bf16.msra.mxu0 0
        %814 = vmatpush.bf16.msra.mxu0 0
        %815 = vmatpush.bf16.msra.mxu0 0
        %816 = vmatpush.bf16.msra.mxu0 0
        %817 = vmatpush.bf16.msra.mxu0 %v802
        %818 = vmatpush.bf16.msra.mxu0 %v801
        %819 = vmatpush.bf16.msra.mxu0 %v800
        %820 = vmatpush.bf16.msra.mxu0 %v799
        %821 = vmatmul.bf16.gmra.mxu0 %v808
        %v822 = vpop.f32.mrf.mxu0
        %v823 = vadd.f32 0.0, %v822
        %v824 = vpop.f32.mrf.mxu0
        %v825 = vadd.f32 0.0, %v824
        %826 = vmatmul.bf16.gmra.mxu0 %v811
        %v827 = vpop.f32.mrf.mxu0
        %v828 = vadd.f32 0.0, %v827
        %v829 = vpop.f32.mrf.mxu0
        %830 = vdwg.mxu0
        %v831 = vadd.f32 %v756, %v823
        %v832 = vadd.f32 %v757, %v825
        %v833 = vadd.f32 %v758, %v828
        %s834 = scalar_lea.vmem %s2, 128
        %v835 = vld [vmem:[%s834] sm:$0xf]
        %v836 = vld [vmem:[%s834 + $0x4] sm:$0xf]
        %v837 = vld [vmem:[%s834 + $0x8] sm:$0xf]
        %v838 = vld [vmem:[%s834 + $0xc] sm:$0xf]
        %v839 = vld [vmem:[%s834 + $0x10] sm:$0xf]
        %v840 = vld [vmem:[%s834 + $0x14] sm:$0xf]
        %v841 = vld [vmem:[%s834 + $0x18] sm:$0xf]
        %v842 = vld [vmem:[%s834 + $0x1c] sm:$0xf]
        %v843 = vshrl.u32 %v781, 16
        %v845 = vshll.u32 %v781, 16
        %v847 = vrot.slane %v845, 1
        %v848 = vor.u32 %v843, %v847
        %v849 = vshll.u32 %v782, 16
        %v851 = vrot.slane %v849, 1
        %v852 = vsel %vm585, %v848, %v851
        %v853 = vshrl.u32 %v782, 16
        %v863 = vunpack.c.l.b16 %v835
        %v864 = vunpack.c.l.b16 %v836
        %v865 = vunpack.c.l.b16 %v837
        %v866 = vunpack.c.l.b16 %v838
        %v867 = vunpack.c.l.b16 %v839
        %v868 = vunpack.c.l.b16 %v840
        %v869 = vunpack.c.l.b16 %v841
        %v870 = vunpack.c.l.b16 %v842
        %v871 = vpack.c.b16 %v864, %v863
        %v872 = vpack.c.b16 %v866, %v865
        %v873 = vpack.c.b16 %v868, %v867
        %v874 = vpack.c.b16 %v870, %v869
        %v880 = vsel %vm624, %v852, 0
        %v883 = vsel %vm624, %v853, 0
        %885 = vmatpush.bf16.msra.mxu0 0
        %886 = vmatpush.bf16.msra.mxu0 0
        %887 = vmatpush.bf16.msra.mxu0 0
        %888 = vmatpush.bf16.msra.mxu0 0
        %889 = vmatpush.bf16.msra.mxu0 %v874
        %890 = vmatpush.bf16.msra.mxu0 %v873
        %891 = vmatpush.bf16.msra.mxu0 %v872
        %892 = vmatpush.bf16.msra.mxu0 %v871
        %893 = vmatmul.bf16.gmra.mxu0 %v880
        %v894 = vpop.f32.mrf.mxu0
        %v895 = vadd.f32 0.0, %v894
        %v896 = vpop.f32.mrf.mxu0
        %v897 = vadd.f32 0.0, %v896
        %898 = vmatmul.bf16.gmra.mxu0 %v883
        %v899 = vpop.f32.mrf.mxu0
        %v900 = vadd.f32 0.0, %v899
        %v901 = vpop.f32.mrf.mxu0
        %902 = vdwg.mxu0
        %v903 = vadd.f32 %v831, %v895
        %v904 = vadd.f32 %v832, %v897
        %v905 = vadd.f32 %v833, %v900
        %s906 = scalar_lea.vmem %s2, 160
        %v907 = vld [vmem:[%s906] sm:$0xf]
        %v908 = vld [vmem:[%s906 + $0x4] sm:$0xf]
        %v909 = vld [vmem:[%s906 + $0x8] sm:$0xf]
        %v910 = vld [vmem:[%s906 + $0xc] sm:$0xf]
        %v911 = vld [vmem:[%s906 + $0x10] sm:$0xf]
        %v912 = vld [vmem:[%s906 + $0x14] sm:$0xf]
        %v913 = vld [vmem:[%s906 + $0x18] sm:$0xf]
        %v914 = vld [vmem:[%s906 + $0x1c] sm:$0xf]
        %v915 = vrot.slane %v781, 1
        %v916 = vrot.slane %v782, 1
        %v917 = vsel %vm704, %v915, %v916
        %v926 = vunpack.c.l.b16 %v907
        %v927 = vunpack.c.l.b16 %v908
        %v928 = vunpack.c.l.b16 %v909
        %v929 = vunpack.c.l.b16 %v910
        %v930 = vunpack.c.l.b16 %v911
        %v931 = vunpack.c.l.b16 %v912
        %v932 = vunpack.c.l.b16 %v913
        %v933 = vunpack.c.l.b16 %v914
        %v934 = vpack.c.b16 %v927, %v926
        %v935 = vpack.c.b16 %v929, %v928
        %v936 = vpack.c.b16 %v931, %v930
        %v937 = vpack.c.b16 %v933, %v932
        %v943 = vsel %vm624, %v917, 0
        %v946 = vsel %vm624, %v916, 0
        %948 = vmatpush.bf16.msra.mxu0 0
        %949 = vmatpush.bf16.msra.mxu0 0
        %950 = vmatpush.bf16.msra.mxu0 0
        %951 = vmatpush.bf16.msra.mxu0 0
        %952 = vmatpush.bf16.msra.mxu0 %v937
        %953 = vmatpush.bf16.msra.mxu0 %v936
        %954 = vmatpush.bf16.msra.mxu0 %v935
        %955 = vmatpush.bf16.msra.mxu0 %v934
        %956 = vmatmul.bf16.gmra.mxu0 %v943
        %v957 = vpop.f32.mrf.mxu0
        %v958 = vadd.f32 0.0, %v957
        %v959 = vpop.f32.mrf.mxu0
        %v960 = vadd.f32 0.0, %v959
        %961 = vmatmul.bf16.gmra.mxu0 %v946
        %v962 = vpop.f32.mrf.mxu0
        %v963 = vadd.f32 0.0, %v962
        %v964 = vpop.f32.mrf.mxu0
        %965 = vdwg.mxu0
        %v966 = vadd.f32 %v903, %v958
        %v967 = vadd.f32 %v904, %v960
        %v968 = vadd.f32 %v905, %v963
        %s969 = sadd.s32 %s547, 2
        %s970 = smul.u32 %s969, 3
        %s971 = smul.addr %s970, 4
        %s972 = scalar_lea.vmem [#allocation2], %s971
        %v973 = vld [vmem:[%s972] sm:$0xf]
        %v974 = vld [vmem:[%s972 + $0x4] sm:$0xf]
        %v975 = vld [vmem:[%s972 + $0x8] sm:$0x3]
        %s976 = scalar_lea.vmem %s2, 192
        %v977 = vld [vmem:[%s976] sm:$0xf]
        %v978 = vld [vmem:[%s976 + $0x4] sm:$0xf]
        %v979 = vld [vmem:[%s976 + $0x8] sm:$0xf]
        %v980 = vld [vmem:[%s976 + $0xc] sm:$0xf]
        %v981 = vld [vmem:[%s976 + $0x10] sm:$0xf]
        %v982 = vld [vmem:[%s976 + $0x14] sm:$0xf]
        %v983 = vld [vmem:[%s976 + $0x18] sm:$0xf]
        %v984 = vld [vmem:[%s976 + $0x1c] sm:$0xf]
        %v988 = vunpack.c.l.b16 %v973
        %v989 = vunpack.c.l.b16 %v974
        %v990 = vunpack.c.l.b16 %v975
        %v991 = vpack.c.b16 %v989, %v988
        %v992 = vpack.c.b16 %v990, %v990
        %v1001 = vunpack.c.l.b16 %v977
        %v1002 = vunpack.c.l.b16 %v978
        %v1003 = vunpack.c.l.b16 %v979
        %v1004 = vunpack.c.l.b16 %v980
        %v1005 = vunpack.c.l.b16 %v981
        %v1006 = vunpack.c.l.b16 %v982
        %v1007 = vunpack.c.l.b16 %v983
        %v1008 = vunpack.c.l.b16 %v984
        %v1009 = vpack.c.b16 %v1002, %v1001
        %v1010 = vpack.c.b16 %v1004, %v1003
        %v1011 = vpack.c.b16 %v1006, %v1005
        %v1012 = vpack.c.b16 %v1008, %v1007
        %v1018 = vsel %vm624, %v991, 0
        %v1021 = vsel %vm624, %v992, 0
        %1023 = vmatpush.bf16.msra.mxu0 0
        %1024 = vmatpush.bf16.msra.mxu0 0
        %1025 = vmatpush.bf16.msra.mxu0 0
        %1026 = vmatpush.bf16.msra.mxu0 0
        %1027 = vmatpush.bf16.msra.mxu0 %v1012
        %1028 = vmatpush.bf16.msra.mxu0 %v1011
        %1029 = vmatpush.bf16.msra.mxu0 %v1010
        %1030 = vmatpush.bf16.msra.mxu0 %v1009
        %1031 = vmatmul.bf16.gmra.mxu0 %v1018
        %v1032 = vpop.f32.mrf.mxu0
        %v1033 = vadd.f32 0.0, %v1032
        %v1034 = vpop.f32.mrf.mxu0
        %v1035 = vadd.f32 0.0, %v1034
        %1036 = vmatmul.bf16.gmra.mxu0 %v1021
        %v1037 = vpop.f32.mrf.mxu0
        %v1038 = vadd.f32 0.0, %v1037
        %v1039 = vpop.f32.mrf.mxu0
        %1040 = vdwg.mxu0
        %v1041 = vadd.f32 %v966, %v1033
        %v1042 = vadd.f32 %v967, %v1035
        %v1043 = vadd.f32 %v968, %v1038
        %s1044 = scalar_lea.vmem %s2, 224
        %v1045 = vld [vmem:[%s1044] sm:$0xf]
        %v1046 = vld [vmem:[%s1044 + $0x4] sm:$0xf]
        %v1047 = vld [vmem:[%s1044 + $0x8] sm:$0xf]
        %v1048 = vld [vmem:[%s1044 + $0xc] sm:$0xf]
        %v1049 = vld [vmem:[%s1044 + $0x10] sm:$0xf]
        %v1050 = vld [vmem:[%s1044 + $0x14] sm:$0xf]
        %v1051 = vld [vmem:[%s1044 + $0x18] sm:$0xf]
        %v1052 = vld [vmem:[%s1044 + $0x1c] sm:$0xf]
        %v1053 = vshrl.u32 %v991, 16
        %v1055 = vshll.u32 %v991, 16
        %v1057 = vrot.slane %v1055, 1
        %v1058 = vor.u32 %v1053, %v1057
        %v1059 = vshll.u32 %v992, 16
        %v1061 = vrot.slane %v1059, 1
        %v1062 = vsel %vm585, %v1058, %v1061
        %v1063 = vshrl.u32 %v992, 16
        %v1073 = vunpack.c.l.b16 %v1045
        %v1074 = vunpack.c.l.b16 %v1046
        %v1075 = vunpack.c.l.b16 %v1047
        %v1076 = vunpack.c.l.b16 %v1048
        %v1077 = vunpack.c.l.b16 %v1049
        %v1078 = vunpack.c.l.b16 %v1050
        %v1079 = vunpack.c.l.b16 %v1051
        %v1080 = vunpack.c.l.b16 %v1052
        %v1081 = vpack.c.b16 %v1074, %v1073
        %v1082 = vpack.c.b16 %v1076, %v1075
        %v1083 = vpack.c.b16 %v1078, %v1077
        %v1084 = vpack.c.b16 %v1080, %v1079
        %v1090 = vsel %vm624, %v1062, 0
        %v1093 = vsel %vm624, %v1063, 0
        %1095 = vmatpush.bf16.msra.mxu0 0
        %1096 = vmatpush.bf16.msra.mxu0 0
        %1097 = vmatpush.bf16.msra.mxu0 0
        %1098 = vmatpush.bf16.msra.mxu0 0
        %1099 = vmatpush.bf16.msra.mxu0 %v1084
        %1100 = vmatpush.bf16.msra.mxu0 %v1083
        %1101 = vmatpush.bf16.msra.mxu0 %v1082
        %1102 = vmatpush.bf16.msra.mxu0 %v1081
        %1103 = vmatmul.bf16.gmra.mxu0 %v1090
        %v1104 = vpop.f32.mrf.mxu0
        %v1105 = vadd.f32 0.0, %v1104
        %v1106 = vpop.f32.mrf.mxu0
        %v1107 = vadd.f32 0.0, %v1106
        %1108 = vmatmul.bf16.gmra.mxu0 %v1093
        %v1109 = vpop.f32.mrf.mxu0
        %v1110 = vadd.f32 0.0, %v1109
        %v1111 = vpop.f32.mrf.mxu0
        %1112 = vdwg.mxu0
        %v1113 = vadd.f32 %v1041, %v1105
        %v1114 = vadd.f32 %v1042, %v1107
        %v1115 = vadd.f32 %v1043, %v1110
        %s1116 = scalar_lea.vmem %s2, 256
        %v1117 = vld [vmem:[%s1116] sm:$0xf]
        %v1118 = vld [vmem:[%s1116 + $0x4] sm:$0xf]
        %v1119 = vld [vmem:[%s1116 + $0x8] sm:$0xf]
        %v1120 = vld [vmem:[%s1116 + $0xc] sm:$0xf]
        %v1121 = vld [vmem:[%s1116 + $0x10] sm:$0xf]
        %v1122 = vld [vmem:[%s1116 + $0x14] sm:$0xf]
        %v1123 = vld [vmem:[%s1116 + $0x18] sm:$0xf]
        %v1124 = vld [vmem:[%s1116 + $0x1c] sm:$0xf]
        %v1125 = vrot.slane %v991, 1
        %v1126 = vrot.slane %v992, 1
        %v1127 = vsel %vm704, %v1125, %v1126
        %v1136 = vunpack.c.l.b16 %v1117
        %v1137 = vunpack.c.l.b16 %v1118
        %v1138 = vunpack.c.l.b16 %v1119
        %v1139 = vunpack.c.l.b16 %v1120
        %v1140 = vunpack.c.l.b16 %v1121
        %v1141 = vunpack.c.l.b16 %v1122
        %v1142 = vunpack.c.l.b16 %v1123
        %v1143 = vunpack.c.l.b16 %v1124
        %v1144 = vpack.c.b16 %v1137, %v1136
        %v1145 = vpack.c.b16 %v1139, %v1138
        %v1146 = vpack.c.b16 %v1141, %v1140
        %v1147 = vpack.c.b16 %v1143, %v1142
        %v1153 = vsel %vm624, %v1127, 0
        %v1156 = vsel %vm624, %v1126, 0
        %1158 = vmatpush.bf16.msra.mxu0 0
        %1159 = vmatpush.bf16.msra.mxu0 0
        %1160 = vmatpush.bf16.msra.mxu0 0
        %1161 = vmatpush.bf16.msra.mxu0 0
        %1162 = vmatpush.bf16.msra.mxu0 %v1147
        %1163 = vmatpush.bf16.msra.mxu0 %v1146
        %1164 = vmatpush.bf16.msra.mxu0 %v1145
        %1165 = vmatpush.bf16.msra.mxu0 %v1144
        %1166 = vmatmul.bf16.gmra.mxu0 %v1153
        %v1167 = vpop.f32.mrf.mxu0
        %v1168 = vadd.f32 0.0, %v1167
        %v1169 = vpop.f32.mrf.mxu0
        %v1170 = vadd.f32 0.0, %v1169
        %1171 = vmatmul.bf16.gmra.mxu0 %v1156
        %v1172 = vpop.f32.mrf.mxu0
        %v1173 = vadd.f32 0.0, %v1172
        %v1174 = vpop.f32.mrf.mxu0
        %1175 = vdwg.mxu0
        %v1176 = vadd.f32 %v1113, %v1168
        %v1177 = vadd.f32 %v1114, %v1170
        %v1178 = vadd.f32 %v1115, %v1173
        %v1179 = vpack.c.bf16 %v1176, %v1176
        %v1180 = vpack.c.bf16 %v1177, %v1177
        %v1181 = vpack.c.bf16 %v1178, %v1178
        %s1182 = smul.addr %s554, 4
        %s1183 = scalar_lea.vmem %s366, %s1182
        %1184 = vst [vmem:[%s1183] sm:$0xf] %v1179
        %1185 = vst [vmem:[%s1183 + $0x4] sm:$0xf] %v1180
        %vm1186 = vcmask 1040384
        %vm1187 = vsmask.f32 256
        %vm1188 = vmand %vm1186, %vm1187
        %v1189 = vld [vmem:[%s1183 + $0x8] sm:$0x1]
        %v1190 = vsel %vm1188, %v1181, %v1189
        %1191 = vst [vmem:[%s1183 + $0x8] sm:$0x1] %v1190
        %v1192 = vunpack.c.l.bf16 %v1179
        %v1193 = vunpack.c.l.bf16 %v1180
        %v1194 = vunpack.c.l.bf16 %v1181
        %v1195 = vadd.f32 %v1192, %v1193
        %vm1196 = vcmask 1040384
        %v1197 = vsel %vm1196, %v1194, 0.0
        %v1198 = vadd.f32 %v1195, %v1197
        %v1199 = vrot.slane %v1198, 4
        %v1200 = vadd.f32 %v1198, %v1199
        %v1201 = vrot.slane %v1200, 2
        %v1202 = vadd.f32 %v1200, %v1201
        %v1203 = vrot.slane %v1202, 1
        %v1204 = vadd.f32 %v1202, %v1203
        %v1205 = vadd.f32 %v552, %v1204
        %v1206 = vmul.f32 %v1192, %v1192
        %v1207 = vmul.f32 %v1193, %v1193
        %v1208 = vmul.f32 %v1194, %v1194
        %v1209 = vadd.f32 %v1206, %v1207
        %v1210 = vsel %vm1196, %v1208, 0.0
        %v1211 = vadd.f32 %v1209, %v1210
        %v1212 = vrot.slane %v1211, 4
        %v1213 = vadd.f32 %v1211, %v1212
        %v1214 = vrot.slane %v1213, 2
        %v1215 = vadd.f32 %v1213, %v1214
        %v1216 = vrot.slane %v1215, 1
        %v1217 = vadd.f32 %v1215, %v1216
        %v1218 = vadd.f32 %v553, %v1217
      $region37: #{conv_up.2} parent=31 // loop_footer
        %s551 = sadd.s32 1, %s547
      $region38: #{conv_up.2} parent=31 // loop_footer_branch
        %546 = sbr.rel target = $region34
      $region39: #{conv_up.2} parent=31 // loop_exit
        _
      %1219 = vst [vmem:[%s373] sm:$0x1] %v552
      %1220 = vst [vmem:[%s379] sm:$0x1] %v553
      %s1221 = smul.u32 18, %s22
      %p1222 = scmp.lt.s32.totalorder %s21, 1
      %s1223 = scalar_select %p1222, %s21, 1
      %p1224 = scmp.lt.s32.totalorder %s1221, 17
      %s1225 = scalar_select %p1224, %s1221, 17
      %s1226 = smul.addr %s1225, 3
      %s1227 = smul.addr %s1223, 54
      %s1228 = sadd.s32 %s1226, %s1227
      %s1229 = smul.addr %s1228, 4
      %s1230 = scalar_lea.vmem %s3, %s1229
      %p1231 = scmp.lt.s32.totalorder %s21, 1
      %s1232 = scalar_select %p1231, %s21, 1
      %p1233 = scmp.lt.s32.totalorder %s22, 0
      %s1234 = scalar_select %p1233, %s22, 0
      %s1235 = sadd.s32 %s1234, %s1232
      %s1236 = scalar_lea.vmem %s4, %s1235
      %p1237 = scmp.lt.s32.totalorder %s21, 1
      %s1238 = scalar_select %p1237, %s21, 1
      %p1239 = scmp.lt.s32.totalorder %s22, 0
      %s1240 = scalar_select %p1239, %s22, 0
      %s1241 = sadd.s32 %s1240, %s1238
      %s1242 = scalar_lea.vmem %s5, %s1241
      // Predicated region
      $region40: #{conv_up.2} parent=31 // pred_check
        %p1243 = pneg %p130
      $region41: #{conv_up.2} parent=31 // pred_check_branch
        %1245 = sbr.rel (%p1243) target = $region43
      $region42: #{conv_up.2} parent=31 // pred_region
        %s1246 = smul.u32 18, %s22
      $region43: #{conv_up.2} parent=31 // pred_fallthru
        _
      // Predicated region
      $region44: #{conv_up.2} parent=31 // pred_check
        %p1247 = pneg %p158
      $region45: #{conv_up.2} parent=31 // pred_check_branch
        %1249 = sbr.rel (%p1247) target = $region47
      $region46: #{conv_up.2} parent=31 // pred_region
        _
      $region47: #{conv_up.2} parent=31 // pred_fallthru
        _
      // Predicated region
      $region48: #{conv_up.2} parent=31 // pred_check
        %p1250 = pneg %p186
      $region49: #{conv_up.2} parent=31 // pred_check_branch
        %1252 = sbr.rel (%p1250) target = $region51
      $region50: #{conv_up.2} parent=31 // pred_region
        _
      $region51: #{conv_up.2} parent=31 // pred_fallthru
        _
    $region32: #{conv_up.2} parent=5 // pred_fallthru
      _
    %p1253 = scmp.le.s32.totalorder 2, %s12
    // Predicated region
    $region52: #{conv_up.2} parent=5 // pred_check
      %p1254 = pneg %p1253
    $region53: #{conv_up.2} parent=5 // pred_check_branch
      %1256 = sbr.rel (%p1254) target = $region55
    $region54: #{conv_up.2} parent=5 // pred_region
      %s1257 = ssub.s32 %s12, 2
      // Predicated region
      $region56: #{conv_up.2} parent=54 // pred_check
        %p1258 = pneg %p136
      $region57: #{conv_up.2} parent=54 // pred_check_branch
        %1260 = sbr.rel (%p1258) target = $region59
      $region58: #{conv_up.2} parent=54 // pred_region
        %s1261 = smul.u32 18, %s24
        %p1262 = scmp.lt.s32.totalorder %s23, 1
        %s1263 = scalar_select %p1262, %s23, 1
        %p1264 = scmp.lt.s32.totalorder %s1261, 17
        %s1265 = scalar_select %p1264, %s1261, 17
        %s1266 = smul.addr %s1265, 3
        %s1267 = smul.addr %s1263, 54
        %s1268 = sadd.s32 %s1266, %s1267
        %s1269 = smul.addr %s1268, 4
        %s1270 = scalar_lea.vmem %s3, %s1269
      $region59: #{conv_up.2} parent=54 // pred_fallthru
        _
      // Predicated region
      $region60: #{conv_up.2} parent=54 // pred_check
        %p1271 = pneg %p164
      $region61: #{conv_up.2} parent=54 // pred_check_branch
        %1273 = sbr.rel (%p1271) target = $region63
      $region62: #{conv_up.2} parent=54 // pred_region
        %p1274 = scmp.lt.s32.totalorder %s23, 1
        %s1275 = scalar_select %p1274, %s23, 1
        %p1276 = scmp.lt.s32.totalorder %s24, 0
        %s1277 = scalar_select %p1276, %s24, 0
        %s1278 = sadd.s32 %s1277, %s1275
        %s1279 = scalar_lea.vmem %s4, %s1278
      $region63: #{conv_up.2} parent=54 // pred_fallthru
        _
      // Predicated region
      $region64: #{conv_up.2} parent=54 // pred_check
        %p1280 = pneg %p192
      $region65: #{conv_up.2} parent=54 // pred_check_branch
        %1282 = sbr.rel (%p1280) target = $region67
      $region66: #{conv_up.2} parent=54 // pred_region
        %p1283 = scmp.lt.s32.totalorder %s23, 1
        %s1284 = scalar_select %p1283, %s23, 1
        %p1285 = scmp.lt.s32.totalorder %s24, 0
        %s1286 = scalar_select %p1285, %s24, 0
        %s1287 = sadd.s32 %s1286, %s1284
        %s1288 = scalar_lea.vmem %s5, %s1287
      $region67: #{conv_up.2} parent=54 // pred_fallthru
        _
    $region55: #{conv_up.2} parent=5 // pred_fallthru
      _
  $region6: #{conv_up.2} parent=0 // loop_footer
    %s16 = sadd.s32 1, %s12
  $region7: #{conv_up.2} parent=0 // loop_footer_branch
    %11 = sbr.rel target = $region3
  $region8: #{conv_up.2} parent=0 // loop_exit
    _

</llo_original>
